<compile_context>
chip_gen: v5e
topology: v5e:2x2
jax: 0.10.0
libtpu: 0.0.40
codegen_flags: <defaults>
</compile_context>

<pallas_src>
import functools

import jax
import jax.numpy as jnp
from jax.experimental import pallas as pl
from jax.experimental.pallas import tpu as pltpu


# --------------------------------------------------------------------------- #
# Kernel
# --------------------------------------------------------------------------- #
def spatial_attention_kernel(x_ref, wes_ref, bes_ref, wm_ref, bm_ref, wp_ref,
                             o_ref, *, c_in, c_int, seq_len):
    L = seq_len

    # Per-channel lane slices of the native (nb, C*L) slab (static offsets).
    x_raw = [x_ref[:, c * L:(c + 1) * L] for c in range(c_in)]      # input dtype
    xs = [v.astype(jnp.float32) for v in x_raw]                     # math in f32

    wp = wp_ref[...].astype(jnp.float32)                            # (1, L)
    wc = 1.0 - wp          # wp + wc == 1; edge weights stay exactly 0 / 1

    def pointwise_row(row):
        # One output channel of the stacked encoder/skip pointwise conv:
        # VPU broadcast-MACs with scalar weights from SMEM (C too small for MXU).
        acc = wes_ref[row * c_in] * xs[0]
        for c in range(1, c_in):
            acc = acc + wes_ref[row * c_in + c] * xs[c]
        return acc + bes_ref[row]

    logits = None
    for o in range(c_int):
        enc_o = pointwise_row(o)                         # (nb, L)
        skp_o = pointwise_row(c_int + o)                 # (nb, L)

        # MaxPool1d(2,1) + AvgPool1d(2,1):
        #   s[l] = max(skp[l], skp[l+1]) + (skp[l] + skp[l+1]) / 2
        # Lane L-1 wraps within the same sequence and only ever enters the lerp
        # below with blend weight exactly 0.
        nxt = pltpu.roll(skp_o, shift=L - 1, axis=1)     # skp[:, (l+1) % L]
        s = jnp.maximum(skp_o, nxt) + 0.5 * (skp_o + nxt)

        # F.interpolate(mode='linear', align_corners=False), L-1 -> L, as roll+lerp.
        prv = pltpu.roll(s, shift=1, axis=1)             # s[:, (l-1) % L]
        s_up = wp * prv + wc * s

        # adaptive_avg_pool1d to the same length is the identity -> skipped.
        combo_o = jnp.maximum(enc_o + s_up, 0.0)         # ReLU

        # masker (Cint -> 1) accumulated on the fly (scalar weight from SMEM).
        term = wm_ref[o] * combo_o
        logits = term if logits is None else logits + term

    mask = jax.nn.sigmoid(logits + bm_ref[0])            # (nb, L)
    # F.interpolate of the (already length-L) mask is the identity -> skipped.

    # Epilogue in the input dtype (bf16 stays bf16 on v6e/v7x).
    mask_out = mask.astype(o_ref.dtype)
    for c in range(c_in):
        o_ref[:, c * L:(c + 1) * L] = (x_raw[c] * mask_out).astype(o_ref.dtype)


# --------------------------------------------------------------------------- #
# Glue: interpolation blend weights, BN folding, tiling policy
# --------------------------------------------------------------------------- #
def make_lerp_weights(l):
    """Per-lane blend weights reproducing F.interpolate(mode='linear',
    align_corners=False) from length l-1 to l as
        out[j] = wp[j] * s[j-1] + (1 - wp[j]) * s[j]
    (edge columns j=0 and j=l-1 folded into the weights)."""
    j = jnp.arange(l, dtype=jnp.float32)
    scale = (l - 1) / l
    src = jnp.maximum((j + 0.5) * scale - 0.5, 0.0)
    i0 = jnp.clip(jnp.floor(src), 0.0, float(l - 2))
    frac = src - i0
    wp = jnp.where(j == 0, 0.0, jnp.where(j == l - 1, 1.0, 1.0 - frac))
    return wp


def make_linear_interp_matrix(l_in, l_out):
    """(l_in, l_out) matrix M with out = v @ M == F.interpolate(v, l_out,
    mode='linear', align_corners=False).  Used only by the pure-JAX reference
    (independent of the roll+lerp formulation used in the kernel)."""
    scale = l_in / l_out
    i = jnp.arange(l_out, dtype=jnp.float32)
    src = jnp.maximum((i + 0.5) * scale - 0.5, 0.0)
    i0 = jnp.clip(jnp.floor(src).astype(jnp.int32), 0, l_in - 1)
    i1 = jnp.minimum(i0 + 1, l_in - 1)
    frac = src - i0.astype(jnp.float32)
    M = jnp.zeros((l_in, l_out), dtype=jnp.float32)
    cols = jnp.arange(l_out)
    M = M.at[i0, cols].add(1.0 - frac)
    M = M.at[i1, cols].add(frac)
    return M


def fold_bn(w, b, gamma, beta, mean, var, eps=1e-5):
    """Fold inference-mode BatchNorm1d into a kernel-size-1 Conv1d."""
    scale = gamma / jnp.sqrt(var + eps)
    return w * scale[:, None], scale * (b - mean) + beta


def _plan_batch_tiling(n, seq_bytes, target_bytes):
    """Pick (padded_n, nb) with nb | padded_n and (nb % 8 == 0 or nb == padded_n)
    (BlockSpec sublane rule).  Prefers the widest in-budget chunk that still
    leaves >= 2 grid steps (keeps both v7x TensorCores busy); pads the batch to
    a multiple of 8 only when no legal in-budget split of n itself exists."""
    def choose(m):
        cands = [d for d in range(1, m + 1) if m % d == 0 and (d % 8 == 0 or d == m)]
        within = [d for d in cands if d * seq_bytes <= target_bytes]
        if not within:
            return None
        multi = [d for d in within if m // d >= 2]
        return max(multi) if multi else max(within)

    nb = choose(n)
    if nb is not None:
        return n, nb
    if 8 * seq_bytes <= target_bytes:
        m = -(-n // 8) * 8
        nb = choose(m)
        if nb is not None:
            return m, nb
    # TODO(synk): L-axis tiling with a 1-column halo for extremely long sequences.
    cands = [d for d in range(1, n + 1) if n % d == 0 and (d % 8 == 0 or d == n)]
    return n, min(cands)


# --------------------------------------------------------------------------- #
# Wrapper
# --------------------------------------------------------------------------- #
def spatial_attention(x, params, *, target_step_bytes=8 << 20):
    N, C, L = x.shape
    we, be, ws, bs, wm, bm = params
    c_int = we.shape[0]

    # Stack encoder_conv + skip_conv weights; flatten small params for SMEM.
    wes = jnp.concatenate([we, ws], axis=0).reshape(-1).astype(jnp.float32)  # (2*Cint*C,)
    bes = jnp.concatenate([be, bs], axis=0).astype(jnp.float32)              # (2*Cint,)
    wm_flat = wm.reshape(-1).astype(jnp.float32)                             # (Cint,)
    bm_flat = bm.reshape(-1).astype(jnp.float32)                             # (1,)
    wp_row = make_lerp_weights(L).reshape(1, L)                              # (1, L)

    # Free relayout (contiguous trailing dims merged; no HBM transpose).
    x2 = x.reshape(N, C * L)

    itemsize = jnp.dtype(x.dtype).itemsize
    seq_bytes = 2 * C * L * itemsize                 # in + out rows of one sequence
    n_eff, nb = _plan_batch_tiling(N, seq_bytes, target_step_bytes)
    if n_eff != N:
        x2 = jnp.pad(x2, ((0, n_eff - N), (0, 0)))
    grid = (n_eff // nb,)

    # Explicit VMEM budget: double-buffered in+out tiles plus headroom.
    pad8 = -(-nb // 8) * 8
    pad128 = -(-(C * L) // 128) * 128
    tile_bytes = pad8 * pad128 * itemsize
    vmem_limit = int(max(32 << 20, 4 * tile_bytes + (8 << 20)))

    smem = pl.BlockSpec(memory_space=pltpu.MemorySpace.SMEM)
    kernel = functools.partial(spatial_attention_kernel,
                               c_in=C, c_int=c_int, seq_len=L)

    out2 = pl.pallas_call(
        kernel,
        out_shape=jax.ShapeDtypeStruct((n_eff, C * L), x.dtype),
        grid=grid,
        in_specs=[
            pl.BlockSpec((nb, C * L), lambda i: (i, 0)),   # x slab: whole sequences
            smem, smem, smem, smem,                        # conv / masker weights
            pl.BlockSpec((1, L), lambda i: (0, 0)),        # lerp blend weights
        ],
        out_specs=pl.BlockSpec((nb, C * L), lambda i: (i, 0)),
        compiler_params=pltpu.CompilerParams(
            dimension_semantics=("parallel",),
            vmem_limit_bytes=vmem_limit,
        ),
    )(x2, wes, bes, wm_flat, bm_flat, wp_row)

    if n_eff != N:
        out2 = out2[:N]
    return out2.reshape(N, C, L)


# --------------------------------------------------------------------------- #
# Pure-JAX reference (dense interp matrix -> independent of the roll+lerp path)
# --------------------------------------------------------------------------- #
def spatial_attention_reference(x, params):
    we, be, ws, bs, wm, bm = params
    L = x.shape[-1]
    interp = make_linear_interp_matrix(L - 1, L)
    enc = jnp.einsum('oc,ncl->nol', we, x) + be[None, :, None]
    skp = jnp.einsum('oc,ncl->nol', ws, x) + bs[None, :, None]
    s = jnp.maximum(skp[..., :-1], skp[..., 1:]) + 0.5 * (skp[..., :-1] + skp[..., 1:])
    s_up = jnp.einsum('ncj,jl->ncl', s, interp)
    combo = jnp.maximum(enc + s_up, 0.0)
    logits = jnp.einsum('oc,ncl->nol', wm, combo) + bm[None, :, None]
    return x * jax.nn.sigmoid(logits)


def init_params(key, enc_channels, inter_channels):
    ks = jax.random.split(key, 12)
    # encoder_conv: Conv1d(enc->inter, k=1) + BN(inter)
    we = jax.random.normal(ks[0], (inter_channels, enc_channels), jnp.float32) * 0.5
    be = jax.random.normal(ks[1], (inter_channels,), jnp.float32) * 0.1
    g_e = 1.0 + 0.1 * jax.random.normal(ks[2], (inter_channels,), jnp.float32)
    b_e = 0.1 * jax.random.normal(ks[3], (inter_channels,), jnp.float32)
    m_e = 0.1 * jax.random.normal(ks[4], (inter_channels,), jnp.float32)
    v_e = jax.random.uniform(ks[5], (inter_channels,), jnp.float32, 0.5, 1.5)
    # skip_conv: Conv1d(enc->inter, k=1) + BN(inter)
    ws = jax.random.normal(ks[6], (inter_channels, enc_channels), jnp.float32) * 0.5
    bs = jax.random.normal(ks[7], (inter_channels,), jnp.float32) * 0.1
    g_s = 1.0 + 0.1 * jax.random.normal(ks[8], (inter_channels,), jnp.float32)
    b_s = 0.1 * jax.random.normal(ks[9], (inter_channels,), jnp.float32)
    m_s = 0.1 * jax.random.normal(ks[10], (inter_channels,), jnp.float32)
    v_s = jax.random.uniform(ks[11], (inter_channels,), jnp.float32, 0.5, 1.5)
    # masker: Conv1d(inter->1, k=1) + BN(1)
    km = jax.random.split(ks[0], 6)
    wm = jax.random.normal(km[0], (1, inter_channels), jnp.float32) * 0.5
    bm = jax.random.normal(km[1], (1,), jnp.float32) * 0.1
    g_m = 1.0 + 0.1 * jax.random.normal(km[2], (1,), jnp.float32)
    b_m = 0.1 * jax.random.normal(km[3], (1,), jnp.float32)
    m_m = 0.1 * jax.random.normal(km[4], (1,), jnp.float32)
    v_m = jax.random.uniform(km[5], (1,), jnp.float32, 0.5, 1.5)

    we_f, be_f = fold_bn(we, be, g_e, b_e, m_e, v_e)
    ws_f, bs_f = fold_bn(ws, bs, g_s, b_s, m_s, v_s)
    wm_f, bm_f = fold_bn(wm, bm, g_m, b_m, m_m, v_m)
    return (we_f, be_f, ws_f, bs_f, wm_f, bm_f)


if __name__ == "__main__":
    N, ENC_CH, INTER_CH, L = 2, 4, 8, 16
    key = jax.random.PRNGKey(0)
    kx, kp = jax.random.split(key)
    x = jax.random.normal(kx, (N, ENC_CH, L), jnp.float32)
    params = init_params(kp, ENC_CH, INTER_CH)

    out = jax.block_until_ready(spatial_attention(x, params))
    ref = spatial_attention_reference(x, params)

    assert out.shape == (N, ENC_CH, L)
    assert jnp.allclose(out, ref, atol=1e-5, rtol=1e-5), "Pallas vs reference mismatch"

    print("KERNEL_OK")
</pallas_src>

<mosaic_0001>
module attributes {stable_mosaic.version = 11 : i64} {
  func.func @spatial_attention_kernel(%arg0: i32, %arg1: memref<2x64xf32, #tpu.memory_space<vmem>>, %arg2: memref<64xf32, #tpu.memory_space<smem>>, %arg3: memref<16xf32, #tpu.memory_space<smem>>, %arg4: memref<8xf32, #tpu.memory_space<smem>>, %arg5: memref<1xf32, #tpu.memory_space<smem>>, %arg6: memref<1x16xf32, #tpu.memory_space<vmem>>, %arg7: memref<2x64xf32, #tpu.memory_space<vmem>>) attributes {dimension_semantics = [#tpu.dimension_semantics<parallel>], iteration_bounds = array<i64: 1>, scalar_prefetch = 0 : i64, scratch_operands = 0 : i64, tpu.core_type = #tpu.core_type<tc>, window_params = [{transform_indices = @transform_0, window_bounds = array<i64: 2, 64>}, {transform_indices = @transform_1, window_bounds = array<i64: 64>}, {transform_indices = @transform_2, window_bounds = array<i64: 16>}, {transform_indices = @transform_3, window_bounds = array<i64: 8>}, {transform_indices = @transform_4, window_bounds = array<i64: 1>}, {pipeline_mode = #tpu.pipeline_mode<synchronous>, transform_indices = @transform_5, window_bounds = array<i64: 1, 16>}, {transform_indices = @transform_6, window_bounds = array<i64: 2, 64>}]} {
    %c0 = arith.constant 0 : index
    %c0_0 = arith.constant 0 : index
    %0 = vector.load %arg1[%c0, %c0_0] : memref<2x64xf32, #tpu.memory_space<vmem>>, vector<2x16xf32>
    %c0_1 = arith.constant 0 : index
    %c16 = arith.constant 16 : index
    %1 = vector.load %arg1[%c0_1, %c16] : memref<2x64xf32, #tpu.memory_space<vmem>>, vector<2x16xf32>
    %c0_2 = arith.constant 0 : index
    %c32 = arith.constant 32 : index
    %2 = vector.load %arg1[%c0_2, %c32] : memref<2x64xf32, #tpu.memory_space<vmem>>, vector<2x16xf32>
    %c0_3 = arith.constant 0 : index
    %c48 = arith.constant 48 : index
    %3 = vector.load %arg1[%c0_3, %c48] : memref<2x64xf32, #tpu.memory_space<vmem>>, vector<2x16xf32>
    %c0_4 = arith.constant 0 : index
    %c0_5 = arith.constant 0 : index
    %4 = vector.load %arg6[%c0_4, %c0_5] : memref<1x16xf32, #tpu.memory_space<vmem>>, vector<1x16xf32>
    %cst = arith.constant 1.000000e+00 : f32
    %5 = vector.broadcast %cst : f32 to vector<1x16xf32>
    %6 = arith.subf %5, %4 : vector<1x16xf32>
    %c0_6 = arith.constant 0 : index
    %7 = memref.load %arg2[%c0_6] : memref<64xf32, #tpu.memory_space<smem>>
    %8 = vector.broadcast %7 : f32 to vector<2x16xf32>
    %9 = arith.mulf %8, %0 : vector<2x16xf32>
    %c1 = arith.constant 1 : index
    %10 = memref.load %arg2[%c1] : memref<64xf32, #tpu.memory_space<smem>>
    %11 = vector.broadcast %10 : f32 to vector<2x16xf32>
    %12 = arith.mulf %11, %1 : vector<2x16xf32>
    %13 = arith.addf %9, %12 : vector<2x16xf32>
    %c2 = arith.constant 2 : index
    %14 = memref.load %arg2[%c2] : memref<64xf32, #tpu.memory_space<smem>>
    %15 = vector.broadcast %14 : f32 to vector<2x16xf32>
    %16 = arith.mulf %15, %2 : vector<2x16xf32>
    %17 = arith.addf %13, %16 : vector<2x16xf32>
    %c3 = arith.constant 3 : index
    %18 = memref.load %arg2[%c3] : memref<64xf32, #tpu.memory_space<smem>>
    %19 = vector.broadcast %18 : f32 to vector<2x16xf32>
    %20 = arith.mulf %19, %3 : vector<2x16xf32>
    %21 = arith.addf %17, %20 : vector<2x16xf32>
    %c0_7 = arith.constant 0 : index
    %22 = memref.load %arg3[%c0_7] : memref<16xf32, #tpu.memory_space<smem>>
    %23 = vector.broadcast %22 : f32 to vector<2x16xf32>
    %24 = arith.addf %21, %23 : vector<2x16xf32>
    %c32_8 = arith.constant 32 : index
    %25 = memref.load %arg2[%c32_8] : memref<64xf32, #tpu.memory_space<smem>>
    %26 = vector.broadcast %25 : f32 to vector<2x16xf32>
    %27 = arith.mulf %26, %0 : vector<2x16xf32>
    %c33 = arith.constant 33 : index
    %28 = memref.load %arg2[%c33] : memref<64xf32, #tpu.memory_space<smem>>
    %29 = vector.broadcast %28 : f32 to vector<2x16xf32>
    %30 = arith.mulf %29, %1 : vector<2x16xf32>
    %31 = arith.addf %27, %30 : vector<2x16xf32>
    %c34 = arith.constant 34 : index
    %32 = memref.load %arg2[%c34] : memref<64xf32, #tpu.memory_space<smem>>
    %33 = vector.broadcast %32 : f32 to vector<2x16xf32>
    %34 = arith.mulf %33, %2 : vector<2x16xf32>
    %35 = arith.addf %31, %34 : vector<2x16xf32>
    %c35 = arith.constant 35 : index
    %36 = memref.load %arg2[%c35] : memref<64xf32, #tpu.memory_space<smem>>
    %37 = vector.broadcast %36 : f32 to vector<2x16xf32>
    %38 = arith.mulf %37, %3 : vector<2x16xf32>
    %39 = arith.addf %35, %38 : vector<2x16xf32>
    %c8 = arith.constant 8 : index
    %40 = memref.load %arg3[%c8] : memref<16xf32, #tpu.memory_space<smem>>
    %41 = vector.broadcast %40 : f32 to vector<2x16xf32>
    %42 = arith.addf %39, %41 : vector<2x16xf32>
    %c15_i32 = arith.constant 15 : i32
    %43 = tpu.dynamic_rotate %42 by %c15_i32 dim 1 : vector<2x16xf32>, i32 -> vector<2x16xf32>
    %44 = arith.maximumf %42, %43 : vector<2x16xf32>
    %45 = arith.addf %42, %43 : vector<2x16xf32>
    %cst_9 = arith.constant 5.000000e-01 : f32
    %46 = vector.broadcast %cst_9 : f32 to vector<2x16xf32>
    %47 = arith.mulf %46, %45 : vector<2x16xf32>
    %48 = arith.addf %44, %47 : vector<2x16xf32>
    %c1_i32 = arith.constant 1 : i32
    %49 = tpu.dynamic_rotate %48 by %c1_i32 dim 1 : vector<2x16xf32>, i32 -> vector<2x16xf32>
    %50 = vector.broadcast %4 : vector<1x16xf32> to vector<2x16xf32>
    %51 = arith.mulf %50, %49 : vector<2x16xf32>
    %52 = vector.broadcast %6 : vector<1x16xf32> to vector<2x16xf32>
    %53 = arith.mulf %52, %48 : vector<2x16xf32>
    %54 = arith.addf %51, %53 : vector<2x16xf32>
    %55 = arith.addf %24, %54 : vector<2x16xf32>
    %cst_10 = arith.constant 0.000000e+00 : f32
    %56 = vector.broadcast %cst_10 : f32 to vector<2x16xf32>
    %57 = arith.maximumf %55, %56 : vector<2x16xf32>
    %c0_11 = arith.constant 0 : index
    %58 = memref.load %arg4[%c0_11] : memref<8xf32, #tpu.memory_space<smem>>
    %59 = vector.broadcast %58 : f32 to vector<2x16xf32>
    %60 = arith.mulf %59, %57 : vector<2x16xf32>
    %c4 = arith.constant 4 : index
    %61 = memref.load %arg2[%c4] : memref<64xf32, #tpu.memory_space<smem>>
    %62 = vector.broadcast %61 : f32 to vector<2x16xf32>
    %63 = arith.mulf %62, %0 : vector<2x16xf32>
    %c5 = arith.constant 5 : index
    %64 = memref.load %arg2[%c5] : memref<64xf32, #tpu.memory_space<smem>>
    %65 = vector.broadcast %64 : f32 to vector<2x16xf32>
    %66 = arith.mulf %65, %1 : vector<2x16xf32>
    %67 = arith.addf %63, %66 : vector<2x16xf32>
    %c6 = arith.constant 6 : index
    %68 = memref.load %arg2[%c6] : memref<64xf32, #tpu.memory_space<smem>>
    %69 = vector.broadcast %68 : f32 to vector<2x16xf32>
    %70 = arith.mulf %69, %2 : vector<2x16xf32>
    %71 = arith.addf %67, %70 : vector<2x16xf32>
    %c7 = arith.constant 7 : index
    %72 = memref.load %arg2[%c7] : memref<64xf32, #tpu.memory_space<smem>>
    %73 = vector.broadcast %72 : f32 to vector<2x16xf32>
    %74 = arith.mulf %73, %3 : vector<2x16xf32>
    %75 = arith.addf %71, %74 : vector<2x16xf32>
    %c1_12 = arith.constant 1 : index
    %76 = memref.load %arg3[%c1_12] : memref<16xf32, #tpu.memory_space<smem>>
    %77 = vector.broadcast %76 : f32 to vector<2x16xf32>
    %78 = arith.addf %75, %77 : vector<2x16xf32>
    %c36 = arith.constant 36 : index
    %79 = memref.load %arg2[%c36] : memref<64xf32, #tpu.memory_space<smem>>
    %80 = vector.broadcast %79 : f32 to vector<2x16xf32>
    %81 = arith.mulf %80, %0 : vector<2x16xf32>
    %c37 = arith.constant 37 : index
    %82 = memref.load %arg2[%c37] : memref<64xf32, #tpu.memory_space<smem>>
    %83 = vector.broadcast %82 : f32 to vector<2x16xf32>
    %84 = arith.mulf %83, %1 : vector<2x16xf32>
    %85 = arith.addf %81, %84 : vector<2x16xf32>
    %c38 = arith.constant 38 : index
    %86 = memref.load %arg2[%c38] : memref<64xf32, #tpu.memory_space<smem>>
    %87 = vector.broadcast %86 : f32 to vector<2x16xf32>
    %88 = arith.mulf %87, %2 : vector<2x16xf32>
    %89 = arith.addf %85, %88 : vector<2x16xf32>
    %c39 = arith.constant 39 : index
    %90 = memref.load %arg2[%c39] : memref<64xf32, #tpu.memory_space<smem>>
    %91 = vector.broadcast %90 : f32 to vector<2x16xf32>
    %92 = arith.mulf %91, %3 : vector<2x16xf32>
    %93 = arith.addf %89, %92 : vector<2x16xf32>
    %c9 = arith.constant 9 : index
    %94 = memref.load %arg3[%c9] : memref<16xf32, #tpu.memory_space<smem>>
    %95 = vector.broadcast %94 : f32 to vector<2x16xf32>
    %96 = arith.addf %93, %95 : vector<2x16xf32>
    %c15_i32_13 = arith.constant 15 : i32
    %97 = tpu.dynamic_rotate %96 by %c15_i32_13 dim 1 : vector<2x16xf32>, i32 -> vector<2x16xf32>
    %98 = arith.maximumf %96, %97 : vector<2x16xf32>
    %99 = arith.addf %96, %97 : vector<2x16xf32>
    %cst_14 = arith.constant 5.000000e-01 : f32
    %100 = vector.broadcast %cst_14 : f32 to vector<2x16xf32>
    %101 = arith.mulf %100, %99 : vector<2x16xf32>
    %102 = arith.addf %98, %101 : vector<2x16xf32>
    %c1_i32_15 = arith.constant 1 : i32
    %103 = tpu.dynamic_rotate %102 by %c1_i32_15 dim 1 : vector<2x16xf32>, i32 -> vector<2x16xf32>
    %104 = vector.broadcast %4 : vector<1x16xf32> to vector<2x16xf32>
    %105 = arith.mulf %104, %103 : vector<2x16xf32>
    %106 = vector.broadcast %6 : vector<1x16xf32> to vector<2x16xf32>
    %107 = arith.mulf %106, %102 : vector<2x16xf32>
    %108 = arith.addf %105, %107 : vector<2x16xf32>
    %109 = arith.addf %78, %108 : vector<2x16xf32>
    %cst_16 = arith.constant 0.000000e+00 : f32
    %110 = vector.broadcast %cst_16 : f32 to vector<2x16xf32>
    %111 = arith.maximumf %109, %110 : vector<2x16xf32>
    %c1_17 = arith.constant 1 : index
    %112 = memref.load %arg4[%c1_17] : memref<8xf32, #tpu.memory_space<smem>>
    %113 = vector.broadcast %112 : f32 to vector<2x16xf32>
    %114 = arith.mulf %113, %111 : vector<2x16xf32>
    %115 = arith.addf %60, %114 : vector<2x16xf32>
    %c8_18 = arith.constant 8 : index
    %116 = memref.load %arg2[%c8_18] : memref<64xf32, #tpu.memory_space<smem>>
    %117 = vector.broadcast %116 : f32 to vector<2x16xf32>
    %118 = arith.mulf %117, %0 : vector<2x16xf32>
    %c9_19 = arith.constant 9 : index
    %119 = memref.load %arg2[%c9_19] : memref<64xf32, #tpu.memory_space<smem>>
    %120 = vector.broadcast %119 : f32 to vector<2x16xf32>
    %121 = arith.mulf %120, %1 : vector<2x16xf32>
    %122 = arith.addf %118, %121 : vector<2x16xf32>
    %c10 = arith.constant 10 : index
    %123 = memref.load %arg2[%c10] : memref<64xf32, #tpu.memory_space<smem>>
    %124 = vector.broadcast %123 : f32 to vector<2x16xf32>
    %125 = arith.mulf %124, %2 : vector<2x16xf32>
    %126 = arith.addf %122, %125 : vector<2x16xf32>
    %c11 = arith.constant 11 : index
    %127 = memref.load %arg2[%c11] : memref<64xf32, #tpu.memory_space<smem>>
    %128 = vector.broadcast %127 : f32 to vector<2x16xf32>
    %129 = arith.mulf %128, %3 : vector<2x16xf32>
    %130 = arith.addf %126, %129 : vector<2x16xf32>
    %c2_20 = arith.constant 2 : index
    %131 = memref.load %arg3[%c2_20] : memref<16xf32, #tpu.memory_space<smem>>
    %132 = vector.broadcast %131 : f32 to vector<2x16xf32>
    %133 = arith.addf %130, %132 : vector<2x16xf32>
    %c40 = arith.constant 40 : index
    %134 = memref.load %arg2[%c40] : memref<64xf32, #tpu.memory_space<smem>>
    %135 = vector.broadcast %134 : f32 to vector<2x16xf32>
    %136 = arith.mulf %135, %0 : vector<2x16xf32>
    %c41 = arith.constant 41 : index
    %137 = memref.load %arg2[%c41] : memref<64xf32, #tpu.memory_space<smem>>
    %138 = vector.broadcast %137 : f32 to vector<2x16xf32>
    %139 = arith.mulf %138, %1 : vector<2x16xf32>
    %140 = arith.addf %136, %139 : vector<2x16xf32>
    %c42 = arith.constant 42 : index
    %141 = memref.load %arg2[%c42] : memref<64xf32, #tpu.memory_space<smem>>
    %142 = vector.broadcast %141 : f32 to vector<2x16xf32>
    %143 = arith.mulf %142, %2 : vector<2x16xf32>
    %144 = arith.addf %140, %143 : vector<2x16xf32>
    %c43 = arith.constant 43 : index
    %145 = memref.load %arg2[%c43] : memref<64xf32, #tpu.memory_space<smem>>
    %146 = vector.broadcast %145 : f32 to vector<2x16xf32>
    %147 = arith.mulf %146, %3 : vector<2x16xf32>
    %148 = arith.addf %144, %147 : vector<2x16xf32>
    %c10_21 = arith.constant 10 : index
    %149 = memref.load %arg3[%c10_21] : memref<16xf32, #tpu.memory_space<smem>>
    %150 = vector.broadcast %149 : f32 to vector<2x16xf32>
    %151 = arith.addf %148, %150 : vector<2x16xf32>
    %c15_i32_22 = arith.constant 15 : i32
    %152 = tpu.dynamic_rotate %151 by %c15_i32_22 dim 1 : vector<2x16xf32>, i32 -> vector<2x16xf32>
    %153 = arith.maximumf %151, %152 : vector<2x16xf32>
    %154 = arith.addf %151, %152 : vector<2x16xf32>
    %cst_23 = arith.constant 5.000000e-01 : f32
    %155 = vector.broadcast %cst_23 : f32 to vector<2x16xf32>
    %156 = arith.mulf %155, %154 : vector<2x16xf32>
    %157 = arith.addf %153, %156 : vector<2x16xf32>
    %c1_i32_24 = arith.constant 1 : i32
    %158 = tpu.dynamic_rotate %157 by %c1_i32_24 dim 1 : vector<2x16xf32>, i32 -> vector<2x16xf32>
    %159 = vector.broadcast %4 : vector<1x16xf32> to vector<2x16xf32>
    %160 = arith.mulf %159, %158 : vector<2x16xf32>
    %161 = vector.broadcast %6 : vector<1x16xf32> to vector<2x16xf32>
    %162 = arith.mulf %161, %157 : vector<2x16xf32>
    %163 = arith.addf %160, %162 : vector<2x16xf32>
    %164 = arith.addf %133, %163 : vector<2x16xf32>
    %cst_25 = arith.constant 0.000000e+00 : f32
    %165 = vector.broadcast %cst_25 : f32 to vector<2x16xf32>
    %166 = arith.maximumf %164, %165 : vector<2x16xf32>
    %c2_26 = arith.constant 2 : index
    %167 = memref.load %arg4[%c2_26] : memref<8xf32, #tpu.memory_space<smem>>
    %168 = vector.broadcast %167 : f32 to vector<2x16xf32>
    %169 = arith.mulf %168, %166 : vector<2x16xf32>
    %170 = arith.addf %115, %169 : vector<2x16xf32>
    %c12 = arith.constant 12 : index
    %171 = memref.load %arg2[%c12] : memref<64xf32, #tpu.memory_space<smem>>
    %172 = vector.broadcast %171 : f32 to vector<2x16xf32>
    %173 = arith.mulf %172, %0 : vector<2x16xf32>
    %c13 = arith.constant 13 : index
    %174 = memref.load %arg2[%c13] : memref<64xf32, #tpu.memory_space<smem>>
    %175 = vector.broadcast %174 : f32 to vector<2x16xf32>
    %176 = arith.mulf %175, %1 : vector<2x16xf32>
    %177 = arith.addf %173, %176 : vector<2x16xf32>
    %c14 = arith.constant 14 : index
    %178 = memref.load %arg2[%c14] : memref<64xf32, #tpu.memory_space<smem>>
    %179 = vector.broadcast %178 : f32 to vector<2x16xf32>
    %180 = arith.mulf %179, %2 : vector<2x16xf32>
    %181 = arith.addf %177, %180 : vector<2x16xf32>
    %c15 = arith.constant 15 : index
    %182 = memref.load %arg2[%c15] : memref<64xf32, #tpu.memory_space<smem>>
    %183 = vector.broadcast %182 : f32 to vector<2x16xf32>
    %184 = arith.mulf %183, %3 : vector<2x16xf32>
    %185 = arith.addf %181, %184 : vector<2x16xf32>
    %c3_27 = arith.constant 3 : index
    %186 = memref.load %arg3[%c3_27] : memref<16xf32, #tpu.memory_space<smem>>
    %187 = vector.broadcast %186 : f32 to vector<2x16xf32>
    %188 = arith.addf %185, %187 : vector<2x16xf32>
    %c44 = arith.constant 44 : index
    %189 = memref.load %arg2[%c44] : memref<64xf32, #tpu.memory_space<smem>>
    %190 = vector.broadcast %189 : f32 to vector<2x16xf32>
    %191 = arith.mulf %190, %0 : vector<2x16xf32>
    %c45 = arith.constant 45 : index
    %192 = memref.load %arg2[%c45] : memref<64xf32, #tpu.memory_space<smem>>
    %193 = vector.broadcast %192 : f32 to vector<2x16xf32>
    %194 = arith.mulf %193, %1 : vector<2x16xf32>
    %195 = arith.addf %191, %194 : vector<2x16xf32>
    %c46 = arith.constant 46 : index
    %196 = memref.load %arg2[%c46] : memref<64xf32, #tpu.memory_space<smem>>
    %197 = vector.broadcast %196 : f32 to vector<2x16xf32>
    %198 = arith.mulf %197, %2 : vector<2x16xf32>
    %199 = arith.addf %195, %198 : vector<2x16xf32>
    %c47 = arith.constant 47 : index
    %200 = memref.load %arg2[%c47] : memref<64xf32, #tpu.memory_space<smem>>
    %201 = vector.broadcast %200 : f32 to vector<2x16xf32>
    %202 = arith.mulf %201, %3 : vector<2x16xf32>
    %203 = arith.addf %199, %202 : vector<2x16xf32>
    %c11_28 = arith.constant 11 : index
    %204 = memref.load %arg3[%c11_28] : memref<16xf32, #tpu.memory_space<smem>>
    %205 = vector.broadcast %204 : f32 to vector<2x16xf32>
    %206 = arith.addf %203, %205 : vector<2x16xf32>
    %c15_i32_29 = arith.constant 15 : i32
    %207 = tpu.dynamic_rotate %206 by %c15_i32_29 dim 1 : vector<2x16xf32>, i32 -> vector<2x16xf32>
    %208 = arith.maximumf %206, %207 : vector<2x16xf32>
    %209 = arith.addf %206, %207 : vector<2x16xf32>
    %cst_30 = arith.constant 5.000000e-01 : f32
    %210 = vector.broadcast %cst_30 : f32 to vector<2x16xf32>
    %211 = arith.mulf %210, %209 : vector<2x16xf32>
    %212 = arith.addf %208, %211 : vector<2x16xf32>
    %c1_i32_31 = arith.constant 1 : i32
    %213 = tpu.dynamic_rotate %212 by %c1_i32_31 dim 1 : vector<2x16xf32>, i32 -> vector<2x16xf32>
    %214 = vector.broadcast %4 : vector<1x16xf32> to vector<2x16xf32>
    %215 = arith.mulf %214, %213 : vector<2x16xf32>
    %216 = vector.broadcast %6 : vector<1x16xf32> to vector<2x16xf32>
    %217 = arith.mulf %216, %212 : vector<2x16xf32>
    %218 = arith.addf %215, %217 : vector<2x16xf32>
    %219 = arith.addf %188, %218 : vector<2x16xf32>
    %cst_32 = arith.constant 0.000000e+00 : f32
    %220 = vector.broadcast %cst_32 : f32 to vector<2x16xf32>
    %221 = arith.maximumf %219, %220 : vector<2x16xf32>
    %c3_33 = arith.constant 3 : index
    %222 = memref.load %arg4[%c3_33] : memref<8xf32, #tpu.memory_space<smem>>
    %223 = vector.broadcast %222 : f32 to vector<2x16xf32>
    %224 = arith.mulf %223, %221 : vector<2x16xf32>
    %225 = arith.addf %170, %224 : vector<2x16xf32>
    %c16_34 = arith.constant 16 : index
    %226 = memref.load %arg2[%c16_34] : memref<64xf32, #tpu.memory_space<smem>>
    %227 = vector.broadcast %226 : f32 to vector<2x16xf32>
    %228 = arith.mulf %227, %0 : vector<2x16xf32>
    %c17 = arith.constant 17 : index
    %229 = memref.load %arg2[%c17] : memref<64xf32, #tpu.memory_space<smem>>
    %230 = vector.broadcast %229 : f32 to vector<2x16xf32>
    %231 = arith.mulf %230, %1 : vector<2x16xf32>
    %232 = arith.addf %228, %231 : vector<2x16xf32>
    %c18 = arith.constant 18 : index
    %233 = memref.load %arg2[%c18] : memref<64xf32, #tpu.memory_space<smem>>
    %234 = vector.broadcast %233 : f32 to vector<2x16xf32>
    %235 = arith.mulf %234, %2 : vector<2x16xf32>
    %236 = arith.addf %232, %235 : vector<2x16xf32>
    %c19 = arith.constant 19 : index
    %237 = memref.load %arg2[%c19] : memref<64xf32, #tpu.memory_space<smem>>
    %238 = vector.broadcast %237 : f32 to vector<2x16xf32>
    %239 = arith.mulf %238, %3 : vector<2x16xf32>
    %240 = arith.addf %236, %239 : vector<2x16xf32>
    %c4_35 = arith.constant 4 : index
    %241 = memref.load %arg3[%c4_35] : memref<16xf32, #tpu.memory_space<smem>>
    %242 = vector.broadcast %241 : f32 to vector<2x16xf32>
    %243 = arith.addf %240, %242 : vector<2x16xf32>
    %c48_36 = arith.constant 48 : index
    %244 = memref.load %arg2[%c48_36] : memref<64xf32, #tpu.memory_space<smem>>
    %245 = vector.broadcast %244 : f32 to vector<2x16xf32>
    %246 = arith.mulf %245, %0 : vector<2x16xf32>
    %c49 = arith.constant 49 : index
    %247 = memref.load %arg2[%c49] : memref<64xf32, #tpu.memory_space<smem>>
    %248 = vector.broadcast %247 : f32 to vector<2x16xf32>
    %249 = arith.mulf %248, %1 : vector<2x16xf32>
    %250 = arith.addf %246, %249 : vector<2x16xf32>
    %c50 = arith.constant 50 : index
    %251 = memref.load %arg2[%c50] : memref<64xf32, #tpu.memory_space<smem>>
    %252 = vector.broadcast %251 : f32 to vector<2x16xf32>
    %253 = arith.mulf %252, %2 : vector<2x16xf32>
    %254 = arith.addf %250, %253 : vector<2x16xf32>
    %c51 = arith.constant 51 : index
    %255 = memref.load %arg2[%c51] : memref<64xf32, #tpu.memory_space<smem>>
    %256 = vector.broadcast %255 : f32 to vector<2x16xf32>
    %257 = arith.mulf %256, %3 : vector<2x16xf32>
    %258 = arith.addf %254, %257 : vector<2x16xf32>
    %c12_37 = arith.constant 12 : index
    %259 = memref.load %arg3[%c12_37] : memref<16xf32, #tpu.memory_space<smem>>
    %260 = vector.broadcast %259 : f32 to vector<2x16xf32>
    %261 = arith.addf %258, %260 : vector<2x16xf32>
    %c15_i32_38 = arith.constant 15 : i32
    %262 = tpu.dynamic_rotate %261 by %c15_i32_38 dim 1 : vector<2x16xf32>, i32 -> vector<2x16xf32>
    %263 = arith.maximumf %261, %262 : vector<2x16xf32>
    %264 = arith.addf %261, %262 : vector<2x16xf32>
    %cst_39 = arith.constant 5.000000e-01 : f32
    %265 = vector.broadcast %cst_39 : f32 to vector<2x16xf32>
    %266 = arith.mulf %265, %264 : vector<2x16xf32>
    %267 = arith.addf %263, %266 : vector<2x16xf32>
    %c1_i32_40 = arith.constant 1 : i32
    %268 = tpu.dynamic_rotate %267 by %c1_i32_40 dim 1 : vector<2x16xf32>, i32 -> vector<2x16xf32>
    %269 = vector.broadcast %4 : vector<1x16xf32> to vector<2x16xf32>
    %270 = arith.mulf %269, %268 : vector<2x16xf32>
    %271 = vector.broadcast %6 : vector<1x16xf32> to vector<2x16xf32>
    %272 = arith.mulf %271, %267 : vector<2x16xf32>
    %273 = arith.addf %270, %272 : vector<2x16xf32>
    %274 = arith.addf %243, %273 : vector<2x16xf32>
    %cst_41 = arith.constant 0.000000e+00 : f32
    %275 = vector.broadcast %cst_41 : f32 to vector<2x16xf32>
    %276 = arith.maximumf %274, %275 : vector<2x16xf32>
    %c4_42 = arith.constant 4 : index
    %277 = memref.load %arg4[%c4_42] : memref<8xf32, #tpu.memory_space<smem>>
    %278 = vector.broadcast %277 : f32 to vector<2x16xf32>
    %279 = arith.mulf %278, %276 : vector<2x16xf32>
    %280 = arith.addf %225, %279 : vector<2x16xf32>
    %c20 = arith.constant 20 : index
    %281 = memref.load %arg2[%c20] : memref<64xf32, #tpu.memory_space<smem>>
    %282 = vector.broadcast %281 : f32 to vector<2x16xf32>
    %283 = arith.mulf %282, %0 : vector<2x16xf32>
    %c21 = arith.constant 21 : index
    %284 = memref.load %arg2[%c21] : memref<64xf32, #tpu.memory_space<smem>>
    %285 = vector.broadcast %284 : f32 to vector<2x16xf32>
    %286 = arith.mulf %285, %1 : vector<2x16xf32>
    %287 = arith.addf %283, %286 : vector<2x16xf32>
    %c22 = arith.constant 22 : index
    %288 = memref.load %arg2[%c22] : memref<64xf32, #tpu.memory_space<smem>>
    %289 = vector.broadcast %288 : f32 to vector<2x16xf32>
    %290 = arith.mulf %289, %2 : vector<2x16xf32>
    %291 = arith.addf %287, %290 : vector<2x16xf32>
    %c23 = arith.constant 23 : index
    %292 = memref.load %arg2[%c23] : memref<64xf32, #tpu.memory_space<smem>>
    %293 = vector.broadcast %292 : f32 to vector<2x16xf32>
    %294 = arith.mulf %293, %3 : vector<2x16xf32>
    %295 = arith.addf %291, %294 : vector<2x16xf32>
    %c5_43 = arith.constant 5 : index
    %296 = memref.load %arg3[%c5_43] : memref<16xf32, #tpu.memory_space<smem>>
    %297 = vector.broadcast %296 : f32 to vector<2x16xf32>
    %298 = arith.addf %295, %297 : vector<2x16xf32>
    %c52 = arith.constant 52 : index
    %299 = memref.load %arg2[%c52] : memref<64xf32, #tpu.memory_space<smem>>
    %300 = vector.broadcast %299 : f32 to vector<2x16xf32>
    %301 = arith.mulf %300, %0 : vector<2x16xf32>
    %c53 = arith.constant 53 : index
    %302 = memref.load %arg2[%c53] : memref<64xf32, #tpu.memory_space<smem>>
    %303 = vector.broadcast %302 : f32 to vector<2x16xf32>
    %304 = arith.mulf %303, %1 : vector<2x16xf32>
    %305 = arith.addf %301, %304 : vector<2x16xf32>
    %c54 = arith.constant 54 : index
    %306 = memref.load %arg2[%c54] : memref<64xf32, #tpu.memory_space<smem>>
    %307 = vector.broadcast %306 : f32 to vector<2x16xf32>
    %308 = arith.mulf %307, %2 : vector<2x16xf32>
    %309 = arith.addf %305, %308 : vector<2x16xf32>
    %c55 = arith.constant 55 : index
    %310 = memref.load %arg2[%c55] : memref<64xf32, #tpu.memory_space<smem>>
    %311 = vector.broadcast %310 : f32 to vector<2x16xf32>
    %312 = arith.mulf %311, %3 : vector<2x16xf32>
    %313 = arith.addf %309, %312 : vector<2x16xf32>
    %c13_44 = arith.constant 13 : index
    %314 = memref.load %arg3[%c13_44] : memref<16xf32, #tpu.memory_space<smem>>
    %315 = vector.broadcast %314 : f32 to vector<2x16xf32>
    %316 = arith.addf %313, %315 : vector<2x16xf32>
    %c15_i32_45 = arith.constant 15 : i32
    %317 = tpu.dynamic_rotate %316 by %c15_i32_45 dim 1 : vector<2x16xf32>, i32 -> vector<2x16xf32>
    %318 = arith.maximumf %316, %317 : vector<2x16xf32>
    %319 = arith.addf %316, %317 : vector<2x16xf32>
    %cst_46 = arith.constant 5.000000e-01 : f32
    %320 = vector.broadcast %cst_46 : f32 to vector<2x16xf32>
    %321 = arith.mulf %320, %319 : vector<2x16xf32>
    %322 = arith.addf %318, %321 : vector<2x16xf32>
    %c1_i32_47 = arith.constant 1 : i32
    %323 = tpu.dynamic_rotate %322 by %c1_i32_47 dim 1 : vector<2x16xf32>, i32 -> vector<2x16xf32>
    %324 = vector.broadcast %4 : vector<1x16xf32> to vector<2x16xf32>
    %325 = arith.mulf %324, %323 : vector<2x16xf32>
    %326 = vector.broadcast %6 : vector<1x16xf32> to vector<2x16xf32>
    %327 = arith.mulf %326, %322 : vector<2x16xf32>
    %328 = arith.addf %325, %327 : vector<2x16xf32>
    %329 = arith.addf %298, %328 : vector<2x16xf32>
    %cst_48 = arith.constant 0.000000e+00 : f32
    %330 = vector.broadcast %cst_48 : f32 to vector<2x16xf32>
    %331 = arith.maximumf %329, %330 : vector<2x16xf32>
    %c5_49 = arith.constant 5 : index
    %332 = memref.load %arg4[%c5_49] : memref<8xf32, #tpu.memory_space<smem>>
    %333 = vector.broadcast %332 : f32 to vector<2x16xf32>
    %334 = arith.mulf %333, %331 : vector<2x16xf32>
    %335 = arith.addf %280, %334 : vector<2x16xf32>
    %c24 = arith.constant 24 : index
    %336 = memref.load %arg2[%c24] : memref<64xf32, #tpu.memory_space<smem>>
    %337 = vector.broadcast %336 : f32 to vector<2x16xf32>
    %338 = arith.mulf %337, %0 : vector<2x16xf32>
    %c25 = arith.constant 25 : index
    %339 = memref.load %arg2[%c25] : memref<64xf32, #tpu.memory_space<smem>>
    %340 = vector.broadcast %339 : f32 to vector<2x16xf32>
    %341 = arith.mulf %340, %1 : vector<2x16xf32>
    %342 = arith.addf %338, %341 : vector<2x16xf32>
    %c26 = arith.constant 26 : index
    %343 = memref.load %arg2[%c26] : memref<64xf32, #tpu.memory_space<smem>>
    %344 = vector.broadcast %343 : f32 to vector<2x16xf32>
    %345 = arith.mulf %344, %2 : vector<2x16xf32>
    %346 = arith.addf %342, %345 : vector<2x16xf32>
    %c27 = arith.constant 27 : index
    %347 = memref.load %arg2[%c27] : memref<64xf32, #tpu.memory_space<smem>>
    %348 = vector.broadcast %347 : f32 to vector<2x16xf32>
    %349 = arith.mulf %348, %3 : vector<2x16xf32>
    %350 = arith.addf %346, %349 : vector<2x16xf32>
    %c6_50 = arith.constant 6 : index
    %351 = memref.load %arg3[%c6_50] : memref<16xf32, #tpu.memory_space<smem>>
    %352 = vector.broadcast %351 : f32 to vector<2x16xf32>
    %353 = arith.addf %350, %352 : vector<2x16xf32>
    %c56 = arith.constant 56 : index
    %354 = memref.load %arg2[%c56] : memref<64xf32, #tpu.memory_space<smem>>
    %355 = vector.broadcast %354 : f32 to vector<2x16xf32>
    %356 = arith.mulf %355, %0 : vector<2x16xf32>
    %c57 = arith.constant 57 : index
    %357 = memref.load %arg2[%c57] : memref<64xf32, #tpu.memory_space<smem>>
    %358 = vector.broadcast %357 : f32 to vector<2x16xf32>
    %359 = arith.mulf %358, %1 : vector<2x16xf32>
    %360 = arith.addf %356, %359 : vector<2x16xf32>
    %c58 = arith.constant 58 : index
    %361 = memref.load %arg2[%c58] : memref<64xf32, #tpu.memory_space<smem>>
    %362 = vector.broadcast %361 : f32 to vector<2x16xf32>
    %363 = arith.mulf %362, %2 : vector<2x16xf32>
    %364 = arith.addf %360, %363 : vector<2x16xf32>
    %c59 = arith.constant 59 : index
    %365 = memref.load %arg2[%c59] : memref<64xf32, #tpu.memory_space<smem>>
    %366 = vector.broadcast %365 : f32 to vector<2x16xf32>
    %367 = arith.mulf %366, %3 : vector<2x16xf32>
    %368 = arith.addf %364, %367 : vector<2x16xf32>
    %c14_51 = arith.constant 14 : index
    %369 = memref.load %arg3[%c14_51] : memref<16xf32, #tpu.memory_space<smem>>
    %370 = vector.broadcast %369 : f32 to vector<2x16xf32>
    %371 = arith.addf %368, %370 : vector<2x16xf32>
    %c15_i32_52 = arith.constant 15 : i32
    %372 = tpu.dynamic_rotate %371 by %c15_i32_52 dim 1 : vector<2x16xf32>, i32 -> vector<2x16xf32>
    %373 = arith.maximumf %371, %372 : vector<2x16xf32>
    %374 = arith.addf %371, %372 : vector<2x16xf32>
    %cst_53 = arith.constant 5.000000e-01 : f32
    %375 = vector.broadcast %cst_53 : f32 to vector<2x16xf32>
    %376 = arith.mulf %375, %374 : vector<2x16xf32>
    %377 = arith.addf %373, %376 : vector<2x16xf32>
    %c1_i32_54 = arith.constant 1 : i32
    %378 = tpu.dynamic_rotate %377 by %c1_i32_54 dim 1 : vector<2x16xf32>, i32 -> vector<2x16xf32>
    %379 = vector.broadcast %4 : vector<1x16xf32> to vector<2x16xf32>
    %380 = arith.mulf %379, %378 : vector<2x16xf32>
    %381 = vector.broadcast %6 : vector<1x16xf32> to vector<2x16xf32>
    %382 = arith.mulf %381, %377 : vector<2x16xf32>
    %383 = arith.addf %380, %382 : vector<2x16xf32>
    %384 = arith.addf %353, %383 : vector<2x16xf32>
    %cst_55 = arith.constant 0.000000e+00 : f32
    %385 = vector.broadcast %cst_55 : f32 to vector<2x16xf32>
    %386 = arith.maximumf %384, %385 : vector<2x16xf32>
    %c6_56 = arith.constant 6 : index
    %387 = memref.load %arg4[%c6_56] : memref<8xf32, #tpu.memory_space<smem>>
    %388 = vector.broadcast %387 : f32 to vector<2x16xf32>
    %389 = arith.mulf %388, %386 : vector<2x16xf32>
    %390 = arith.addf %335, %389 : vector<2x16xf32>
    %c28 = arith.constant 28 : index
    %391 = memref.load %arg2[%c28] : memref<64xf32, #tpu.memory_space<smem>>
    %392 = vector.broadcast %391 : f32 to vector<2x16xf32>
    %393 = arith.mulf %392, %0 : vector<2x16xf32>
    %c29 = arith.constant 29 : index
    %394 = memref.load %arg2[%c29] : memref<64xf32, #tpu.memory_space<smem>>
    %395 = vector.broadcast %394 : f32 to vector<2x16xf32>
    %396 = arith.mulf %395, %1 : vector<2x16xf32>
    %397 = arith.addf %393, %396 : vector<2x16xf32>
    %c30 = arith.constant 30 : index
    %398 = memref.load %arg2[%c30] : memref<64xf32, #tpu.memory_space<smem>>
    %399 = vector.broadcast %398 : f32 to vector<2x16xf32>
    %400 = arith.mulf %399, %2 : vector<2x16xf32>
    %401 = arith.addf %397, %400 : vector<2x16xf32>
    %c31 = arith.constant 31 : index
    %402 = memref.load %arg2[%c31] : memref<64xf32, #tpu.memory_space<smem>>
    %403 = vector.broadcast %402 : f32 to vector<2x16xf32>
    %404 = arith.mulf %403, %3 : vector<2x16xf32>
    %405 = arith.addf %401, %404 : vector<2x16xf32>
    %c7_57 = arith.constant 7 : index
    %406 = memref.load %arg3[%c7_57] : memref<16xf32, #tpu.memory_space<smem>>
    %407 = vector.broadcast %406 : f32 to vector<2x16xf32>
    %408 = arith.addf %405, %407 : vector<2x16xf32>
    %c60 = arith.constant 60 : index
    %409 = memref.load %arg2[%c60] : memref<64xf32, #tpu.memory_space<smem>>
    %410 = vector.broadcast %409 : f32 to vector<2x16xf32>
    %411 = arith.mulf %410, %0 : vector<2x16xf32>
    %c61 = arith.constant 61 : index
    %412 = memref.load %arg2[%c61] : memref<64xf32, #tpu.memory_space<smem>>
    %413 = vector.broadcast %412 : f32 to vector<2x16xf32>
    %414 = arith.mulf %413, %1 : vector<2x16xf32>
    %415 = arith.addf %411, %414 : vector<2x16xf32>
    %c62 = arith.constant 62 : index
    %416 = memref.load %arg2[%c62] : memref<64xf32, #tpu.memory_space<smem>>
    %417 = vector.broadcast %416 : f32 to vector<2x16xf32>
    %418 = arith.mulf %417, %2 : vector<2x16xf32>
    %419 = arith.addf %415, %418 : vector<2x16xf32>
    %c63 = arith.constant 63 : index
    %420 = memref.load %arg2[%c63] : memref<64xf32, #tpu.memory_space<smem>>
    %421 = vector.broadcast %420 : f32 to vector<2x16xf32>
    %422 = arith.mulf %421, %3 : vector<2x16xf32>
    %423 = arith.addf %419, %422 : vector<2x16xf32>
    %c15_58 = arith.constant 15 : index
    %424 = memref.load %arg3[%c15_58] : memref<16xf32, #tpu.memory_space<smem>>
    %425 = vector.broadcast %424 : f32 to vector<2x16xf32>
    %426 = arith.addf %423, %425 : vector<2x16xf32>
    %c15_i32_59 = arith.constant 15 : i32
    %427 = tpu.dynamic_rotate %426 by %c15_i32_59 dim 1 : vector<2x16xf32>, i32 -> vector<2x16xf32>
    %428 = arith.maximumf %426, %427 : vector<2x16xf32>
    %429 = arith.addf %426, %427 : vector<2x16xf32>
    %cst_60 = arith.constant 5.000000e-01 : f32
    %430 = vector.broadcast %cst_60 : f32 to vector<2x16xf32>
    %431 = arith.mulf %430, %429 : vector<2x16xf32>
    %432 = arith.addf %428, %431 : vector<2x16xf32>
    %c1_i32_61 = arith.constant 1 : i32
    %433 = tpu.dynamic_rotate %432 by %c1_i32_61 dim 1 : vector<2x16xf32>, i32 -> vector<2x16xf32>
    %434 = vector.broadcast %4 : vector<1x16xf32> to vector<2x16xf32>
    %435 = arith.mulf %434, %433 : vector<2x16xf32>
    %436 = vector.broadcast %6 : vector<1x16xf32> to vector<2x16xf32>
    %437 = arith.mulf %436, %432 : vector<2x16xf32>
    %438 = arith.addf %435, %437 : vector<2x16xf32>
    %439 = arith.addf %408, %438 : vector<2x16xf32>
    %cst_62 = arith.constant 0.000000e+00 : f32
    %440 = vector.broadcast %cst_62 : f32 to vector<2x16xf32>
    %441 = arith.maximumf %439, %440 : vector<2x16xf32>
    %c7_63 = arith.constant 7 : index
    %442 = memref.load %arg4[%c7_63] : memref<8xf32, #tpu.memory_space<smem>>
    %443 = vector.broadcast %442 : f32 to vector<2x16xf32>
    %444 = arith.mulf %443, %441 : vector<2x16xf32>
    %445 = arith.addf %390, %444 : vector<2x16xf32>
    %c0_64 = arith.constant 0 : index
    %446 = memref.load %arg5[%c0_64] : memref<1xf32, #tpu.memory_space<smem>>
    %447 = vector.broadcast %446 : f32 to vector<2x16xf32>
    %448 = arith.addf %445, %447 : vector<2x16xf32>
    %449 = arith.negf %448 : vector<2x16xf32>
    %450 = math.exp %449 : vector<2x16xf32>
    %cst_65 = arith.constant 1.000000e+00 : f32
    %451 = vector.broadcast %cst_65 : f32 to vector<2x16xf32>
    %452 = arith.addf %451, %450 : vector<2x16xf32>
    %453 = arith.divf %451, %452 : vector<2x16xf32>
    %454 = arith.mulf %0, %453 : vector<2x16xf32>
    %c0_66 = arith.constant 0 : index
    %c0_67 = arith.constant 0 : index
    %455 = vector.load %arg7[%c0_66, %c0_67] : memref<2x64xf32, #tpu.memory_space<vmem>>, vector<2x16xf32>
    tpu.vector_store %arg7[%c0_66, %c0_67], %454 {strides = array<i32>} : memref<2x64xf32, #tpu.memory_space<vmem>>, vector<2x16xf32>,
    %456 = arith.mulf %1, %453 : vector<2x16xf32>
    %c0_68 = arith.constant 0 : index
    %c16_69 = arith.constant 16 : index
    %457 = vector.load %arg7[%c0_68, %c16_69] : memref<2x64xf32, #tpu.memory_space<vmem>>, vector<2x16xf32>
    tpu.vector_store %arg7[%c0_68, %c16_69], %456 {strides = array<i32>} : memref<2x64xf32, #tpu.memory_space<vmem>>, vector<2x16xf32>,
    %458 = arith.mulf %2, %453 : vector<2x16xf32>
    %c0_70 = arith.constant 0 : index
    %c32_71 = arith.constant 32 : index
    %459 = vector.load %arg7[%c0_70, %c32_71] : memref<2x64xf32, #tpu.memory_space<vmem>>, vector<2x16xf32>
    tpu.vector_store %arg7[%c0_70, %c32_71], %458 {strides = array<i32>} : memref<2x64xf32, #tpu.memory_space<vmem>>, vector<2x16xf32>,
    %460 = arith.mulf %3, %453 : vector<2x16xf32>
    %c0_72 = arith.constant 0 : index
    %c48_73 = arith.constant 48 : index
    %461 = vector.load %arg7[%c0_72, %c48_73] : memref<2x64xf32, #tpu.memory_space<vmem>>, vector<2x16xf32>
    tpu.vector_store %arg7[%c0_72, %c48_73], %460 {strides = array<i32>} : memref<2x64xf32, #tpu.memory_space<vmem>>, vector<2x16xf32>,
    return
  }
  func.func @transform_0(%arg0: i32) -> (i32, i32) {
    %c0_i32 = arith.constant 0 : i32
    %c0_i32_0 = arith.constant 0 : i32
    return %arg0, %c0_i32 : i32, i32
  }
  func.func @transform_1(%arg0: i32) -> i32 {
    %c0_i32 = arith.constant 0 : i32
    %c0_i32_0 = arith.constant 0 : i32
    return %c0_i32 : i32
  }
  func.func @transform_2(%arg0: i32) -> i32 {
    %c0_i32 = arith.constant 0 : i32
    %c0_i32_0 = arith.constant 0 : i32
    return %c0_i32 : i32
  }
  func.func @transform_3(%arg0: i32) -> i32 {
    %c0_i32 = arith.constant 0 : i32
    %c0_i32_0 = arith.constant 0 : i32
    return %c0_i32 : i32
  }
  func.func @transform_4(%arg0: i32) -> i32 {
    %c0_i32 = arith.constant 0 : i32
    %c0_i32_0 = arith.constant 0 : i32
    return %c0_i32 : i32
  }
  func.func @transform_5(%arg0: i32) -> (i32, i32) {
    %c0_i32 = arith.constant 0 : i32
    %c0_i32_0 = arith.constant 0 : i32
    %c0_i32_1 = arith.constant 0 : i32
    return %c0_i32, %c0_i32_0 : i32, i32
  }
  func.func @transform_6(%arg0: i32) -> (i32, i32) {
    %c0_i32 = arith.constant 0 : i32
    %c0_i32_0 = arith.constant 0 : i32
    return %arg0, %c0_i32 : i32, i32
  }
}

</mosaic_0001>

<llo_original>
// kernel: tpu_custom_call.1
$region0: #{tpu_custom_call.1}
  #allocation0 [shape = 'u32[]', space=smem, size = 0x4, offset = 0x4, fixed_abs, tag = 'smem constant byte address 0x4 - core index']
  #allocation1 [shape = 'u32[72,128]{1,0:T(1,128)}', space=vmem, size = 0x9000, scoped, tag = 'internal scratch']
  #allocation2 [shape = 'f32[1]{0:T(128)S(6)}', space=smem, size = 0x200, scoped, tag = 'scoped memory for tpu_custom_call.1']
  %s0 = inlined_call_operand.vmem [shape: f32[2,64], index: 0, kind: input, shape index: {}]
  %s1 = inlined_call_operand.hbm [shape: f32[64], index: 1, kind: input, shape index: {}]
  %s2 = inlined_call_operand.vmem [shape: f32[16], index: 2, kind: input, shape index: {}]
  %s3 = inlined_call_operand.vmem [shape: f32[8], index: 3, kind: input, shape index: {}]
  %s4 = inlined_call_operand.<no memory space> [shape: f32[1], index: 4, kind: input, shape index: {}]
  %s5 = inlined_call_operand.vmem [shape: f32[1,16], index: 5, kind: input, shape index: {}]
  %s6 = inlined_call_operand.hbm [shape: f32[2,64], index: 6, kind: output, shape index: {}]
  %s7 = sld [smem:[#allocation0]]
  $region46: #{tpu_custom_call.1} parent=0
    _
  %s9 = ssub.s32 1, %s7
  %s10 = scalar_select 0, %s9, %s7
  %11 = sst [smem:[#allocation2]] %s4
  $region1: #{tpu_custom_call.1} parent=0
    #allocation3 [shape = 'u8[512]{0}', space=smem, size = 0x200, scoped, tag = 'input window, operand 1, single buffered']
    #allocation4 [shape = 's32[1]{0}', space=sflag, size = 0x4, scoped, tag = 'scoped memory for tpu_custom_call.1']
    #allocation5 [shape = 's32[1]{0}', space=sflag, size = 0x4, scoped, tag = 'scoped memory for tpu_custom_call.1']
    #allocation6 [shape = 's32[1]{0}', space=sflag, size = 0x4, scoped, tag = 'scoped memory for tpu_custom_call.1']
    #allocation7 [shape = 'u8[512]{0}', space=smem, size = 0x200, scoped, tag = 'input window, operand 2, single buffered']
    #allocation8 [shape = 'u8[512]{0}', space=smem, size = 0x200, scoped, tag = 'input window, operand 3, single buffered']
    #allocation9 [shape = 's32[1]{0}', space=sflag, size = 0x4, scoped, tag = 'scoped memory for tpu_custom_call.1']
    #allocation10 [shape = 'u8[1024]{0}', space=vmem, size = 0x400, scoped, tag = 'output window, operand 0, single buffered']
    %12 = vsyncpa [#allocation5], 0
    %13 = vsyncpa [#allocation6], 0
    %14 = vsyncpa [#allocation9], 0
    %15 = vsyncpa [#allocation4], 0
    // Predicated region
    $region2: #{tpu_custom_call.1} parent=1 // pred_check
      _
    $region3: #{tpu_custom_call.1} parent=1 // pred_check_branch
      %17 = sbr.rel (0) target = $region5
    $region4: #{tpu_custom_call.1} parent=1 // pred_region
      _
    $region5: #{tpu_custom_call.1} parent=1 // pred_fallthru
      _
    // Predicated region
    $region6: #{tpu_custom_call.1} parent=1 // pred_check
      _
    $region7: #{tpu_custom_call.1} parent=1 // pred_check_branch
      %19 = sbr.rel (0) target = $region9
    $region8: #{tpu_custom_call.1} parent=1 // pred_region
      %21 = vsyncadd [#allocation5], 0
      %s23 = sshll.u32 %s1, 4
      %s24 = int_to_ptr.hbm [resolvable:$true] %s23
      %26 = dma.hbm_to_smem %s24, 16, [#allocation3], [#allocation5]
    $region9: #{tpu_custom_call.1} parent=1 // pred_fallthru
      _
    // Predicated region
    $region10: #{tpu_custom_call.1} parent=1 // pred_check
      _
    $region11: #{tpu_custom_call.1} parent=1 // pred_check_branch
      %28 = sbr.rel (0) target = $region13
    $region12: #{tpu_custom_call.1} parent=1 // pred_region
      %30 = vsyncadd [#allocation6], 0
      %s32 = sshll.u32 %s2, 4
      %s33 = int_to_ptr.vmem [resolvable:$true] %s32
      %35 = dma.vmem_to_smem %s33, 16, [#allocation7], [#allocation6]
    $region13: #{tpu_custom_call.1} parent=1 // pred_fallthru
      _
    // Predicated region
    $region14: #{tpu_custom_call.1} parent=1 // pred_check
      _
    $region15: #{tpu_custom_call.1} parent=1 // pred_check_branch
      %37 = sbr.rel (0) target = $region17
    $region16: #{tpu_custom_call.1} parent=1 // pred_region
      %39 = vsyncadd [#allocation9], 0
      %s41 = sshll.u32 %s3, 4
      %s42 = int_to_ptr.vmem [resolvable:$true] %s41
      %44 = dma.vmem_to_smem %s42, 16, [#allocation8], [#allocation9]
    $region17: #{tpu_custom_call.1} parent=1 // pred_fallthru
      _
    // Predicated region
    $region18: #{tpu_custom_call.1} parent=1 // pred_check
      _
    $region19: #{tpu_custom_call.1} parent=1 // pred_check_branch
      %46 = sbr.rel (0) target = $region21
    $region20: #{tpu_custom_call.1} parent=1 // pred_region
      _
    $region21: #{tpu_custom_call.1} parent=1 // pred_fallthru
      _
    // Predicated region
    $region22: #{tpu_custom_call.1} parent=1 // pred_check
      _
    $region23: #{tpu_custom_call.1} parent=1 // pred_check_branch
      %48 = sbr.rel (0) target = $region25
    $region24: #{tpu_custom_call.1} parent=1 // pred_region
      _
    $region25: #{tpu_custom_call.1} parent=1 // pred_fallthru
      _
    // Predicated region
    $region26: #{tpu_custom_call.1} parent=1 // pred_check
      _
    $region27: #{tpu_custom_call.1} parent=1 // pred_check_branch
      %50 = sbr.rel (0) target = $region29
    $region28: #{tpu_custom_call.1} parent=1 // pred_region
      %52 = dma.done [#allocation5], 16
    $region29: #{tpu_custom_call.1} parent=1 // pred_fallthru
      _
    // Predicated region
    $region30: #{tpu_custom_call.1} parent=1 // pred_check
      _
    $region31: #{tpu_custom_call.1} parent=1 // pred_check_branch
      %54 = sbr.rel (0) target = $region33
    $region32: #{tpu_custom_call.1} parent=1 // pred_region
      %56 = dma.done [#allocation6], 16
    $region33: #{tpu_custom_call.1} parent=1 // pred_fallthru
      _
    // Predicated region
    $region34: #{tpu_custom_call.1} parent=1 // pred_check
      _
    $region35: #{tpu_custom_call.1} parent=1 // pred_check_branch
      %58 = sbr.rel (0) target = $region37
    $region36: #{tpu_custom_call.1} parent=1 // pred_region
      %60 = dma.done [#allocation9], 16
    $region37: #{tpu_custom_call.1} parent=1 // pred_fallthru
      _
    %61 = sfence
    %v62 = vld [vmem:[%s0] sm:$0x3]
    %v63 = vld [vmem:[%s5] sm:$0x1]
    %v64 = vsub.f32 1.0, %v63
    %s65 = sld [smem:[#allocation3]]
    %v66 = vstv %s65
    %v67 = vmul.f32 %v66, %v62
    %s68 = sld [smem:[#allocation3 + $0x1]]
    %v69 = vstv %s68
    %v70 = vmul.f32 %v69, %v62
    %72 = vrot.lane.b32.xlu0 %v70, 112
    %v73 = vpop.permute.xlu0 %72
    %v75 = vadd.f32 %v67, %v73
    %s76 = sld [smem:[#allocation3 + $0x2]]
    %v77 = vstv %s76
    %v78 = vmul.f32 %v77, %v62
    %80 = vrot.lane.b32.xlu0 %v78, 96
    %v81 = vpop.permute.xlu0 %80
    %v83 = vadd.f32 %v75, %v81
    %s84 = sld [smem:[#allocation3 + $0x3]]
    %v85 = vstv %s84
    %v86 = vmul.f32 %v85, %v62
    %88 = vrot.lane.b32.xlu0 %v86, 80
    %v89 = vpop.permute.xlu0 %88
    %v91 = vadd.f32 %v83, %v89
    %s92 = sld [smem:[#allocation7]]
    %v93 = vstv %s92
    %v94 = vadd.f32 %v91, %v93
    %s95 = sld [smem:[#allocation3 + $0x20]]
    %v96 = vstv %s95
    %v97 = vmul.f32 %v96, %v62
    %s98 = sld [smem:[#allocation3 + $0x21]]
    %v99 = vstv %s98
    %v100 = vmul.f32 %v99, %v62
    %102 = vrot.lane.b32.xlu0 %v100, 112
    %v103 = vpop.permute.xlu0 %102
    %v105 = vadd.f32 %v97, %v103
    %s106 = sld [smem:[#allocation3 + $0x22]]
    %v107 = vstv %s106
    %v108 = vmul.f32 %v107, %v62
    %110 = vrot.lane.b32.xlu0 %v108, 96
    %v111 = vpop.permute.xlu0 %110
    %v113 = vadd.f32 %v105, %v111
    %s114 = sld [smem:[#allocation3 + $0x23]]
    %v115 = vstv %s114
    %v116 = vmul.f32 %v115, %v62
    %118 = vrot.lane.b32.xlu0 %v116, 80
    %v119 = vpop.permute.xlu0 %118
    %v121 = vadd.f32 %v113, %v119
    %s122 = sld [smem:[#allocation7 + $0x8]]
    %v123 = vstv %s122
    %v124 = vadd.f32 %v121, %v123
    %vm125 = vcmask 1047680
    %126 = vrot.lane.b32.xlu0 %v124, 16
    %v127 = vpop.permute.xlu0 %126
    %v128 = vsel %vm125, %v127, %v124
    %129 = vrot.lane.b32.xlu0 %v128, 16
    %v130 = vpop.permute.xlu0 %129
    %v131 = vsel %vm125, %v130, %v124
    %133 = vrot.lane.b32.xlu0 %v131, 127
    %v134 = vpop.permute.xlu0 %133
    %v136 = vmax.f32 %v124, %v134
    %v137 = vadd.f32 %v124, %v134
    %v138 = vmul.f32 %v137, 0.5
    %v139 = vadd.f32 %v136, %v138
    %140 = vrot.lane.b32.xlu0 %v139, 16
    %v141 = vpop.permute.xlu0 %140
    %v142 = vsel %vm125, %v141, %v139
    %143 = vrot.lane.b32.xlu0 %v142, 16
    %v144 = vpop.permute.xlu0 %143
    %v145 = vsel %vm125, %v144, %v139
    %v147 = vperm.slane %v63, 0
    %150 = vrot.lane.b32.xlu0 %v145, 113
    %v151 = vpop.permute.xlu0 %150
    %v153 = vmul.f32 %v147, %v151
    %v155 = vperm.slane %v64, 0
    %v157 = vmul.f32 %v155, %v139
    %v158 = vadd.f32 %v153, %v157
    %v159 = vadd.f32 %v94, %v158
    %v160 = vmax.f32 %v159, 0.0
    %s161 = sld [smem:[#allocation8]]
    %v162 = vstv %s161
    %v163 = vmul.f32 %v162, %v160
    %s164 = sld [smem:[#allocation3 + $0x4]]
    %v165 = vstv %s164
    %v166 = vmul.f32 %v165, %v62
    %s167 = sld [smem:[#allocation3 + $0x5]]
    %v168 = vstv %s167
    %v169 = vmul.f32 %v168, %v62
    %171 = vrot.lane.b32.xlu0 %v169, 112
    %v172 = vpop.permute.xlu0 %171
    %v174 = vadd.f32 %v166, %v172
    %s175 = sld [smem:[#allocation3 + $0x6]]
    %v176 = vstv %s175
    %v177 = vmul.f32 %v176, %v62
    %179 = vrot.lane.b32.xlu0 %v177, 96
    %v180 = vpop.permute.xlu0 %179
    %v182 = vadd.f32 %v174, %v180
    %s183 = sld [smem:[#allocation3 + $0x7]]
    %v184 = vstv %s183
    %v185 = vmul.f32 %v184, %v62
    %187 = vrot.lane.b32.xlu0 %v185, 80
    %v188 = vpop.permute.xlu0 %187
    %v190 = vadd.f32 %v182, %v188
    %s191 = sld [smem:[#allocation7 + $0x1]]
    %v192 = vstv %s191
    %v193 = vadd.f32 %v190, %v192
    %s194 = sld [smem:[#allocation3 + $0x24]]
    %v195 = vstv %s194
    %v196 = vmul.f32 %v195, %v62
    %s197 = sld [smem:[#allocation3 + $0x25]]
    %v198 = vstv %s197
    %v199 = vmul.f32 %v198, %v62
    %201 = vrot.lane.b32.xlu0 %v199, 112
    %v202 = vpop.permute.xlu0 %201
    %v204 = vadd.f32 %v196, %v202
    %s205 = sld [smem:[#allocation3 + $0x26]]
    %v206 = vstv %s205
    %v207 = vmul.f32 %v206, %v62
    %209 = vrot.lane.b32.xlu0 %v207, 96
    %v210 = vpop.permute.xlu0 %209
    %v212 = vadd.f32 %v204, %v210
    %s213 = sld [smem:[#allocation3 + $0x27]]
    %v214 = vstv %s213
    %v215 = vmul.f32 %v214, %v62
    %217 = vrot.lane.b32.xlu0 %v215, 80
    %v218 = vpop.permute.xlu0 %217
    %v220 = vadd.f32 %v212, %v218
    %s221 = sld [smem:[#allocation7 + $0x9]]
    %v222 = vstv %s221
    %v223 = vadd.f32 %v220, %v222
    %224 = vrot.lane.b32.xlu0 %v223, 16
    %v225 = vpop.permute.xlu0 %224
    %v226 = vsel %vm125, %v225, %v223
    %227 = vrot.lane.b32.xlu0 %v226, 16
    %v228 = vpop.permute.xlu0 %227
    %v229 = vsel %vm125, %v228, %v223
    %231 = vrot.lane.b32.xlu0 %v229, 127
    %v232 = vpop.permute.xlu0 %231
    %v234 = vmax.f32 %v223, %v232
    %v235 = vadd.f32 %v223, %v232
    %v236 = vmul.f32 %v235, 0.5
    %v237 = vadd.f32 %v234, %v236
    %238 = vrot.lane.b32.xlu0 %v237, 16
    %v239 = vpop.permute.xlu0 %238
    %v240 = vsel %vm125, %v239, %v237
    %241 = vrot.lane.b32.xlu0 %v240, 16
    %v242 = vpop.permute.xlu0 %241
    %v243 = vsel %vm125, %v242, %v237
    %245 = vrot.lane.b32.xlu0 %v243, 113
    %v246 = vpop.permute.xlu0 %245
    %v248 = vmul.f32 %v147, %v246
    %v249 = vmul.f32 %v155, %v237
    %v250 = vadd.f32 %v248, %v249
    %v251 = vadd.f32 %v193, %v250
    %v252 = vmax.f32 %v251, 0.0
    %s253 = sld [smem:[#allocation8 + $0x1]]
    %v254 = vstv %s253
    %v255 = vmul.f32 %v254, %v252
    %v256 = vadd.f32 %v163, %v255
    %s257 = sld [smem:[#allocation3 + $0x8]]
    %v258 = vstv %s257
    %v259 = vmul.f32 %v258, %v62
    %s260 = sld [smem:[#allocation3 + $0x9]]
    %v261 = vstv %s260
    %v262 = vmul.f32 %v261, %v62
    %264 = vrot.lane.b32.xlu0 %v262, 112
    %v265 = vpop.permute.xlu0 %264
    %v267 = vadd.f32 %v259, %v265
    %s268 = sld [smem:[#allocation3 + $0xa]]
    %v269 = vstv %s268
    %v270 = vmul.f32 %v269, %v62
    %272 = vrot.lane.b32.xlu0 %v270, 96
    %v273 = vpop.permute.xlu0 %272
    %v275 = vadd.f32 %v267, %v273
    %s276 = sld [smem:[#allocation3 + $0xb]]
    %v277 = vstv %s276
    %v278 = vmul.f32 %v277, %v62
    %280 = vrot.lane.b32.xlu0 %v278, 80
    %v281 = vpop.permute.xlu0 %280
    %v283 = vadd.f32 %v275, %v281
    %s284 = sld [smem:[#allocation7 + $0x2]]
    %v285 = vstv %s284
    %v286 = vadd.f32 %v283, %v285
    %s287 = sld [smem:[#allocation3 + $0x28]]
    %v288 = vstv %s287
    %v289 = vmul.f32 %v288, %v62
    %s290 = sld [smem:[#allocation3 + $0x29]]
    %v291 = vstv %s290
    %v292 = vmul.f32 %v291, %v62
    %294 = vrot.lane.b32.xlu0 %v292, 112
    %v295 = vpop.permute.xlu0 %294
    %v297 = vadd.f32 %v289, %v295
    %s298 = sld [smem:[#allocation3 + $0x2a]]
    %v299 = vstv %s298
    %v300 = vmul.f32 %v299, %v62
    %302 = vrot.lane.b32.xlu0 %v300, 96
    %v303 = vpop.permute.xlu0 %302
    %v305 = vadd.f32 %v297, %v303
    %s306 = sld [smem:[#allocation3 + $0x2b]]
    %v307 = vstv %s306
    %v308 = vmul.f32 %v307, %v62
    %310 = vrot.lane.b32.xlu0 %v308, 80
    %v311 = vpop.permute.xlu0 %310
    %v313 = vadd.f32 %v305, %v311
    %s314 = sld [smem:[#allocation7 + $0xa]]
    %v315 = vstv %s314
    %v316 = vadd.f32 %v313, %v315
    %317 = vrot.lane.b32.xlu0 %v316, 16
    %v318 = vpop.permute.xlu0 %317
    %v319 = vsel %vm125, %v318, %v316
    %320 = vrot.lane.b32.xlu0 %v319, 16
    %v321 = vpop.permute.xlu0 %320
    %v322 = vsel %vm125, %v321, %v316
    %324 = vrot.lane.b32.xlu0 %v322, 127
    %v325 = vpop.permute.xlu0 %324
    %v327 = vmax.f32 %v316, %v325
    %v328 = vadd.f32 %v316, %v325
    %v329 = vmul.f32 %v328, 0.5
    %v330 = vadd.f32 %v327, %v329
    %331 = vrot.lane.b32.xlu0 %v330, 16
    %v332 = vpop.permute.xlu0 %331
    %v333 = vsel %vm125, %v332, %v330
    %334 = vrot.lane.b32.xlu0 %v333, 16
    %v335 = vpop.permute.xlu0 %334
    %v336 = vsel %vm125, %v335, %v330
    %338 = vrot.lane.b32.xlu0 %v336, 113
    %v339 = vpop.permute.xlu0 %338
    %v341 = vmul.f32 %v147, %v339
    %v342 = vmul.f32 %v155, %v330
    %v343 = vadd.f32 %v341, %v342
    %v344 = vadd.f32 %v286, %v343
    %v345 = vmax.f32 %v344, 0.0
    %s346 = sld [smem:[#allocation8 + $0x2]]
    %v347 = vstv %s346
    %v348 = vmul.f32 %v347, %v345
    %v349 = vadd.f32 %v256, %v348
    %s350 = sld [smem:[#allocation3 + $0xc]]
    %v351 = vstv %s350
    %v352 = vmul.f32 %v351, %v62
    %s353 = sld [smem:[#allocation3 + $0xd]]
    %v354 = vstv %s353
    %v355 = vmul.f32 %v354, %v62
    %357 = vrot.lane.b32.xlu0 %v355, 112
    %v358 = vpop.permute.xlu0 %357
    %v360 = vadd.f32 %v352, %v358
    %s361 = sld [smem:[#allocation3 + $0xe]]
    %v362 = vstv %s361
    %v363 = vmul.f32 %v362, %v62
    %365 = vrot.lane.b32.xlu0 %v363, 96
    %v366 = vpop.permute.xlu0 %365
    %v368 = vadd.f32 %v360, %v366
    %s369 = sld [smem:[#allocation3 + $0xf]]
    %v370 = vstv %s369
    %v371 = vmul.f32 %v370, %v62
    %373 = vrot.lane.b32.xlu0 %v371, 80
    %v374 = vpop.permute.xlu0 %373
    %v376 = vadd.f32 %v368, %v374
    %s377 = sld [smem:[#allocation7 + $0x3]]
    %v378 = vstv %s377
    %v379 = vadd.f32 %v376, %v378
    %s380 = sld [smem:[#allocation3 + $0x2c]]
    %v381 = vstv %s380
    %v382 = vmul.f32 %v381, %v62
    %s383 = sld [smem:[#allocation3 + $0x2d]]
    %v384 = vstv %s383
    %v385 = vmul.f32 %v384, %v62
    %387 = vrot.lane.b32.xlu0 %v385, 112
    %v388 = vpop.permute.xlu0 %387
    %v390 = vadd.f32 %v382, %v388
    %s391 = sld [smem:[#allocation3 + $0x2e]]
    %v392 = vstv %s391
    %v393 = vmul.f32 %v392, %v62
    %395 = vrot.lane.b32.xlu0 %v393, 96
    %v396 = vpop.permute.xlu0 %395
    %v398 = vadd.f32 %v390, %v396
    %s399 = sld [smem:[#allocation3 + $0x2f]]
    %v400 = vstv %s399
    %v401 = vmul.f32 %v400, %v62
    %403 = vrot.lane.b32.xlu0 %v401, 80
    %v404 = vpop.permute.xlu0 %403
    %v406 = vadd.f32 %v398, %v404
    %s407 = sld [smem:[#allocation7 + $0xb]]
    %v408 = vstv %s407
    %v409 = vadd.f32 %v406, %v408
    %410 = vrot.lane.b32.xlu0 %v409, 16
    %v411 = vpop.permute.xlu0 %410
    %v412 = vsel %vm125, %v411, %v409
    %413 = vrot.lane.b32.xlu0 %v412, 16
    %v414 = vpop.permute.xlu0 %413
    %v415 = vsel %vm125, %v414, %v409
    %417 = vrot.lane.b32.xlu0 %v415, 127
    %v418 = vpop.permute.xlu0 %417
    %v420 = vmax.f32 %v409, %v418
    %v421 = vadd.f32 %v409, %v418
    %v422 = vmul.f32 %v421, 0.5
    %v423 = vadd.f32 %v420, %v422
    %424 = vrot.lane.b32.xlu0 %v423, 16
    %v425 = vpop.permute.xlu0 %424
    %v426 = vsel %vm125, %v425, %v423
    %427 = vrot.lane.b32.xlu0 %v426, 16
    %v428 = vpop.permute.xlu0 %427
    %v429 = vsel %vm125, %v428, %v423
    %431 = vrot.lane.b32.xlu0 %v429, 113
    %v432 = vpop.permute.xlu0 %431
    %v434 = vmul.f32 %v147, %v432
    %v435 = vmul.f32 %v155, %v423
    %v436 = vadd.f32 %v434, %v435
    %v437 = vadd.f32 %v379, %v436
    %v438 = vmax.f32 %v437, 0.0
    %s439 = sld [smem:[#allocation8 + $0x3]]
    %v440 = vstv %s439
    %v441 = vmul.f32 %v440, %v438
    %v442 = vadd.f32 %v349, %v441
    %s443 = sld [smem:[#allocation3 + $0x10]]
    %v444 = vstv %s443
    %v445 = vmul.f32 %v444, %v62
    %s446 = sld [smem:[#allocation3 + $0x11]]
    %v447 = vstv %s446
    %v448 = vmul.f32 %v447, %v62
    %450 = vrot.lane.b32.xlu0 %v448, 112
    %v451 = vpop.permute.xlu0 %450
    %v453 = vadd.f32 %v445, %v451
    %s454 = sld [smem:[#allocation3 + $0x12]]
    %v455 = vstv %s454
    %v456 = vmul.f32 %v455, %v62
    %458 = vrot.lane.b32.xlu0 %v456, 96
    %v459 = vpop.permute.xlu0 %458
    %v461 = vadd.f32 %v453, %v459
    %s462 = sld [smem:[#allocation3 + $0x13]]
    %v463 = vstv %s462
    %v464 = vmul.f32 %v463, %v62
    %466 = vrot.lane.b32.xlu0 %v464, 80
    %v467 = vpop.permute.xlu0 %466
    %v469 = vadd.f32 %v461, %v467
    %s470 = sld [smem:[#allocation7 + $0x4]]
    %v471 = vstv %s470
    %v472 = vadd.f32 %v469, %v471
    %s473 = sld [smem:[#allocation3 + $0x30]]
    %v474 = vstv %s473
    %v475 = vmul.f32 %v474, %v62
    %s476 = sld [smem:[#allocation3 + $0x31]]
    %v477 = vstv %s476
    %v478 = vmul.f32 %v477, %v62
    %480 = vrot.lane.b32.xlu0 %v478, 112
    %v481 = vpop.permute.xlu0 %480
    %v483 = vadd.f32 %v475, %v481
    %s484 = sld [smem:[#allocation3 + $0x32]]
    %v485 = vstv %s484
    %v486 = vmul.f32 %v485, %v62
    %488 = vrot.lane.b32.xlu0 %v486, 96
    %v489 = vpop.permute.xlu0 %488
    %v491 = vadd.f32 %v483, %v489
    %s492 = sld [smem:[#allocation3 + $0x33]]
    %v493 = vstv %s492
    %v494 = vmul.f32 %v493, %v62
    %496 = vrot.lane.b32.xlu0 %v494, 80
    %v497 = vpop.permute.xlu0 %496
    %v499 = vadd.f32 %v491, %v497
    %s500 = sld [smem:[#allocation7 + $0xc]]
    %v501 = vstv %s500
    %v502 = vadd.f32 %v499, %v501
    %503 = vrot.lane.b32.xlu0 %v502, 16
    %v504 = vpop.permute.xlu0 %503
    %v505 = vsel %vm125, %v504, %v502
    %506 = vrot.lane.b32.xlu0 %v505, 16
    %v507 = vpop.permute.xlu0 %506
    %v508 = vsel %vm125, %v507, %v502
    %510 = vrot.lane.b32.xlu0 %v508, 127
    %v511 = vpop.permute.xlu0 %510
    %v513 = vmax.f32 %v502, %v511
    %v514 = vadd.f32 %v502, %v511
    %v515 = vmul.f32 %v514, 0.5
    %v516 = vadd.f32 %v513, %v515
    %517 = vrot.lane.b32.xlu0 %v516, 16
    %v518 = vpop.permute.xlu0 %517
    %v519 = vsel %vm125, %v518, %v516
    %520 = vrot.lane.b32.xlu0 %v519, 16
    %v521 = vpop.permute.xlu0 %520
    %v522 = vsel %vm125, %v521, %v516
    %524 = vrot.lane.b32.xlu0 %v522, 113
    %v525 = vpop.permute.xlu0 %524
    %v527 = vmul.f32 %v147, %v525
    %v528 = vmul.f32 %v155, %v516
    %v529 = vadd.f32 %v527, %v528
    %v530 = vadd.f32 %v472, %v529
    %v531 = vmax.f32 %v530, 0.0
    %s532 = sld [smem:[#allocation8 + $0x4]]
    %v533 = vstv %s532
    %v534 = vmul.f32 %v533, %v531
    %v535 = vadd.f32 %v442, %v534
    %s536 = sld [smem:[#allocation3 + $0x14]]
    %v537 = vstv %s536
    %v538 = vmul.f32 %v537, %v62
    %s539 = sld [smem:[#allocation3 + $0x15]]
    %v540 = vstv %s539
    %v541 = vmul.f32 %v540, %v62
    %543 = vrot.lane.b32.xlu0 %v541, 112
    %v544 = vpop.permute.xlu0 %543
    %v546 = vadd.f32 %v538, %v544
    %s547 = sld [smem:[#allocation3 + $0x16]]
    %v548 = vstv %s547
    %v549 = vmul.f32 %v548, %v62
    %551 = vrot.lane.b32.xlu0 %v549, 96
    %v552 = vpop.permute.xlu0 %551
    %v554 = vadd.f32 %v546, %v552
    %s555 = sld [smem:[#allocation3 + $0x17]]
    %v556 = vstv %s555
    %v557 = vmul.f32 %v556, %v62
    %559 = vrot.lane.b32.xlu0 %v557, 80
    %v560 = vpop.permute.xlu0 %559
    %v562 = vadd.f32 %v554, %v560
    %s563 = sld [smem:[#allocation7 + $0x5]]
    %v564 = vstv %s563
    %v565 = vadd.f32 %v562, %v564
    %s566 = sld [smem:[#allocation3 + $0x34]]
    %v567 = vstv %s566
    %v568 = vmul.f32 %v567, %v62
    %s569 = sld [smem:[#allocation3 + $0x35]]
    %v570 = vstv %s569
    %v571 = vmul.f32 %v570, %v62
    %573 = vrot.lane.b32.xlu0 %v571, 112
    %v574 = vpop.permute.xlu0 %573
    %v576 = vadd.f32 %v568, %v574
    %s577 = sld [smem:[#allocation3 + $0x36]]
    %v578 = vstv %s577
    %v579 = vmul.f32 %v578, %v62
    %581 = vrot.lane.b32.xlu0 %v579, 96
    %v582 = vpop.permute.xlu0 %581
    %v584 = vadd.f32 %v576, %v582
    %s585 = sld [smem:[#allocation3 + $0x37]]
    %v586 = vstv %s585
    %v587 = vmul.f32 %v586, %v62
    %589 = vrot.lane.b32.xlu0 %v587, 80
    %v590 = vpop.permute.xlu0 %589
    %v592 = vadd.f32 %v584, %v590
    %s593 = sld [smem:[#allocation7 + $0xd]]
    %v594 = vstv %s593
    %v595 = vadd.f32 %v592, %v594
    %596 = vrot.lane.b32.xlu0 %v595, 16
    %v597 = vpop.permute.xlu0 %596
    %v598 = vsel %vm125, %v597, %v595
    %599 = vrot.lane.b32.xlu0 %v598, 16
    %v600 = vpop.permute.xlu0 %599
    %v601 = vsel %vm125, %v600, %v595
    %603 = vrot.lane.b32.xlu0 %v601, 127
    %v604 = vpop.permute.xlu0 %603
    %v606 = vmax.f32 %v595, %v604
    %v607 = vadd.f32 %v595, %v604
    %v608 = vmul.f32 %v607, 0.5
    %v609 = vadd.f32 %v606, %v608
    %610 = vrot.lane.b32.xlu0 %v609, 16
    %v611 = vpop.permute.xlu0 %610
    %v612 = vsel %vm125, %v611, %v609
    %613 = vrot.lane.b32.xlu0 %v612, 16
    %v614 = vpop.permute.xlu0 %613
    %v615 = vsel %vm125, %v614, %v609
    %617 = vrot.lane.b32.xlu0 %v615, 113
    %v618 = vpop.permute.xlu0 %617
    %v620 = vmul.f32 %v147, %v618
    %v621 = vmul.f32 %v155, %v609
    %v622 = vadd.f32 %v620, %v621
    %v623 = vadd.f32 %v565, %v622
    %v624 = vmax.f32 %v623, 0.0
    %s625 = sld [smem:[#allocation8 + $0x5]]
    %v626 = vstv %s625
    %v627 = vmul.f32 %v626, %v624
    %v628 = vadd.f32 %v535, %v627
    %s629 = sld [smem:[#allocation3 + $0x18]]
    %v630 = vstv %s629
    %v631 = vmul.f32 %v630, %v62
    %s632 = sld [smem:[#allocation3 + $0x19]]
    %v633 = vstv %s632
    %v634 = vmul.f32 %v633, %v62
    %636 = vrot.lane.b32.xlu0 %v634, 112
    %v637 = vpop.permute.xlu0 %636
    %v639 = vadd.f32 %v631, %v637
    %s640 = sld [smem:[#allocation3 + $0x1a]]
    %v641 = vstv %s640
    %v642 = vmul.f32 %v641, %v62
    %644 = vrot.lane.b32.xlu0 %v642, 96
    %v645 = vpop.permute.xlu0 %644
    %v647 = vadd.f32 %v639, %v645
    %s648 = sld [smem:[#allocation3 + $0x1b]]
    %v649 = vstv %s648
    %v650 = vmul.f32 %v649, %v62
    %652 = vrot.lane.b32.xlu0 %v650, 80
    %v653 = vpop.permute.xlu0 %652
    %v655 = vadd.f32 %v647, %v653
    %s656 = sld [smem:[#allocation7 + $0x6]]
    %v657 = vstv %s656
    %v658 = vadd.f32 %v655, %v657
    %s659 = sld [smem:[#allocation3 + $0x38]]
    %v660 = vstv %s659
    %v661 = vmul.f32 %v660, %v62
    %s662 = sld [smem:[#allocation3 + $0x39]]
    %v663 = vstv %s662
    %v664 = vmul.f32 %v663, %v62
    %666 = vrot.lane.b32.xlu0 %v664, 112
    %v667 = vpop.permute.xlu0 %666
    %v669 = vadd.f32 %v661, %v667
    %s670 = sld [smem:[#allocation3 + $0x3a]]
    %v671 = vstv %s670
    %v672 = vmul.f32 %v671, %v62
    %674 = vrot.lane.b32.xlu0 %v672, 96
    %v675 = vpop.permute.xlu0 %674
    %v677 = vadd.f32 %v669, %v675
    %s678 = sld [smem:[#allocation3 + $0x3b]]
    %v679 = vstv %s678
    %v680 = vmul.f32 %v679, %v62
    %682 = vrot.lane.b32.xlu0 %v680, 80
    %v683 = vpop.permute.xlu0 %682
    %v685 = vadd.f32 %v677, %v683
    %s686 = sld [smem:[#allocation7 + $0xe]]
    %v687 = vstv %s686
    %v688 = vadd.f32 %v685, %v687
    %689 = vrot.lane.b32.xlu0 %v688, 16
    %v690 = vpop.permute.xlu0 %689
    %v691 = vsel %vm125, %v690, %v688
    %692 = vrot.lane.b32.xlu0 %v691, 16
    %v693 = vpop.permute.xlu0 %692
    %v694 = vsel %vm125, %v693, %v688
    %696 = vrot.lane.b32.xlu0 %v694, 127
    %v697 = vpop.permute.xlu0 %696
    %v699 = vmax.f32 %v688, %v697
    %v700 = vadd.f32 %v688, %v697
    %v701 = vmul.f32 %v700, 0.5
    %v702 = vadd.f32 %v699, %v701
    %703 = vrot.lane.b32.xlu0 %v702, 16
    %v704 = vpop.permute.xlu0 %703
    %v705 = vsel %vm125, %v704, %v702
    %706 = vrot.lane.b32.xlu0 %v705, 16
    %v707 = vpop.permute.xlu0 %706
    %v708 = vsel %vm125, %v707, %v702
    %710 = vrot.lane.b32.xlu0 %v708, 113
    %v711 = vpop.permute.xlu0 %710
    %v713 = vmul.f32 %v147, %v711
    %v714 = vmul.f32 %v155, %v702
    %v715 = vadd.f32 %v713, %v714
    %v716 = vadd.f32 %v658, %v715
    %v717 = vmax.f32 %v716, 0.0
    %s718 = sld [smem:[#allocation8 + $0x6]]
    %v719 = vstv %s718
    %v720 = vmul.f32 %v719, %v717
    %v721 = vadd.f32 %v628, %v720
    %s722 = sld [smem:[#allocation3 + $0x1c]]
    %v723 = vstv %s722
    %v724 = vmul.f32 %v723, %v62
    %s725 = sld [smem:[#allocation3 + $0x1d]]
    %v726 = vstv %s725
    %v727 = vmul.f32 %v726, %v62
    %729 = vrot.lane.b32.xlu0 %v727, 112
    %v730 = vpop.permute.xlu0 %729
    %v732 = vadd.f32 %v724, %v730
    %s733 = sld [smem:[#allocation3 + $0x1e]]
    %v734 = vstv %s733
    %v735 = vmul.f32 %v734, %v62
    %737 = vrot.lane.b32.xlu0 %v735, 96
    %v738 = vpop.permute.xlu0 %737
    %v740 = vadd.f32 %v732, %v738
    %s741 = sld [smem:[#allocation3 + $0x1f]]
    %v742 = vstv %s741
    %v743 = vmul.f32 %v742, %v62
    %745 = vrot.lane.b32.xlu0 %v743, 80
    %v746 = vpop.permute.xlu0 %745
    %v748 = vadd.f32 %v740, %v746
    %s749 = sld [smem:[#allocation7 + $0x7]]
    %v750 = vstv %s749
    %v751 = vadd.f32 %v748, %v750
    %s752 = sld [smem:[#allocation3 + $0x3c]]
    %v753 = vstv %s752
    %v754 = vmul.f32 %v753, %v62
    %s755 = sld [smem:[#allocation3 + $0x3d]]
    %v756 = vstv %s755
    %v757 = vmul.f32 %v756, %v62
    %759 = vrot.lane.b32.xlu0 %v757, 112
    %v760 = vpop.permute.xlu0 %759
    %v762 = vadd.f32 %v754, %v760
    %s763 = sld [smem:[#allocation3 + $0x3e]]
    %v764 = vstv %s763
    %v765 = vmul.f32 %v764, %v62
    %767 = vrot.lane.b32.xlu0 %v765, 96
    %v768 = vpop.permute.xlu0 %767
    %v770 = vadd.f32 %v762, %v768
    %s771 = sld [smem:[#allocation3 + $0x3f]]
    %v772 = vstv %s771
    %v773 = vmul.f32 %v772, %v62
    %775 = vrot.lane.b32.xlu0 %v773, 80
    %v776 = vpop.permute.xlu0 %775
    %v778 = vadd.f32 %v770, %v776
    %s779 = sld [smem:[#allocation7 + $0xf]]
    %v780 = vstv %s779
    %v781 = vadd.f32 %v778, %v780
    %782 = vrot.lane.b32.xlu0 %v781, 16
    %v783 = vpop.permute.xlu0 %782
    %v784 = vsel %vm125, %v783, %v781
    %785 = vrot.lane.b32.xlu0 %v784, 16
    %v786 = vpop.permute.xlu0 %785
    %v787 = vsel %vm125, %v786, %v781
    %789 = vrot.lane.b32.xlu0 %v787, 127
    %v790 = vpop.permute.xlu0 %789
    %v792 = vmax.f32 %v781, %v790
    %v793 = vadd.f32 %v781, %v790
    %v794 = vmul.f32 %v793, 0.5
    %v795 = vadd.f32 %v792, %v794
    %796 = vrot.lane.b32.xlu0 %v795, 16
    %v797 = vpop.permute.xlu0 %796
    %v798 = vsel %vm125, %v797, %v795
    %799 = vrot.lane.b32.xlu0 %v798, 16
    %v800 = vpop.permute.xlu0 %799
    %v801 = vsel %vm125, %v800, %v795
    %803 = vrot.lane.b32.xlu0 %v801, 113
    %v804 = vpop.permute.xlu0 %803
    %v806 = vmul.f32 %v147, %v804
    %v807 = vmul.f32 %v155, %v795
    %v808 = vadd.f32 %v806, %v807
    %v809 = vadd.f32 %v751, %v808
    %v810 = vmax.f32 %v809, 0.0
    %s811 = sld [smem:[#allocation8 + $0x7]]
    %v812 = vstv %s811
    %v813 = vmul.f32 %v812, %v810
    %v814 = vadd.f32 %v721, %v813
    %s815 = sld [smem:[#allocation2]]
    %v816 = vstv %s815
    %v817 = vadd.f32 %v814, %v816
    %v818 = vxor.u32 %v817, 2147483648
    %v819 = vmul.f32 %v818, 1.442695
    %v820 = vpow.pop %v819
    %v821 = vadd.f32 %v820, 1.0
    %v822 = vrcp.pop %v821
    %v823 = vmul.f32 %v821, %v822
    %v824 = vsub.f32 1.0, %v823
    %v825 = vmul.f32 %v822, %v824
    %v826 = vadd.f32 %v822, %v825
    %vm827 = vweird.f32 %v821
    %vm828 = vweird.f32 %v822
    %vm829 = vmor %vm827, %vm828
    %v830 = vsel %vm829, %v822, %v826
    %v831 = vand.u32 2147483647, %v821
    %vm832 = vcmp.eq.f32.partialorder %v831, 8.507059e+37
    %v833 = vand.u32 %v821, 2147483648
    %v834 = vor.u32 1.1754944e-38, %v833
    %v835 = vsel %vm832, %v834, %v830
    %v836 = vmul.f32 1.0, %v835
    %v837 = vmul.f32 %v62, %v836
    %vm838 = vcmask 123904
    %839 = vst.msk [vmem:[#allocation10] sm:$0x3] %vm838, %v837
    %841 = vrot.lane.b32.xlu0 %v836, 16
    %v842 = vpop.permute.xlu0 %841
    %v844 = vmul.f32 %v62, %v842
    %vm845 = vcmask 255104
    %846 = vst.msk [vmem:[#allocation10] sm:$0x3] %vm845, %v844
    %847 = vrot.lane.b32.xlu0 %v836, 32
    %v848 = vpop.permute.xlu0 %847
    %v850 = vmul.f32 %v62, %v848
    %vm851 = vcmask 386304
    %852 = vst.msk [vmem:[#allocation10] sm:$0x3] %vm851, %v850
    %853 = vrot.lane.b32.xlu0 %v836, 48
    %v854 = vpop.permute.xlu0 %853
    %v856 = vmul.f32 %v62, %v854
    %vm857 = vcmask 517504
    %858 = vst.msk [vmem:[#allocation10] sm:$0x3] %vm857, %v856
    // Predicated region
    $region38: #{tpu_custom_call.1} parent=1 // pred_check
      _
    $region39: #{tpu_custom_call.1} parent=1 // pred_check_branch
      %860 = sbr.rel (0) target = $region41
    $region40: #{tpu_custom_call.1} parent=1 // pred_region
      %862 = vsyncadd [#allocation4], 0
      %s864 = sshll.u32 [#allocation10], 4
      %s865 = int_to_ptr.vmem [resolvable:$true] %s864
      %s866 = sshll.u32 %s6, 4
      %s867 = int_to_ptr.hbm [resolvable:$true] %s866
      %869 = dma.vmem_to_hbm [thread:$0]  %s865, 32, %s867, [#allocation4]
    $region41: #{tpu_custom_call.1} parent=1 // pred_fallthru
      _
    // Predicated region
    $region42: #{tpu_custom_call.1} parent=1 // pred_check
      _
    $region43: #{tpu_custom_call.1} parent=1 // pred_check_branch
      %871 = sbr.rel (0) target = $region45
    $region44: #{tpu_custom_call.1} parent=1 // pred_region
      %873 = dma.done [#allocation4], 32
    $region45: #{tpu_custom_call.1} parent=1 // pred_fallthru
      _
    %874 = vsyncpa [#allocation4], 1
    %875 = vsyncpa [#allocation5], 1
    %876 = vsyncpa [#allocation6], 1
    %877 = vsyncpa [#allocation9], 1

</llo_original>
